<compile_context>
chip_gen: v7x
topology: tpu7x:2x2x1
jax: 0.10.0
libtpu: 0.0.40
codegen_flags: <defaults>
</compile_context>

<pallas_src>
import functools
import math

import jax
import jax.numpy as jnp
from jax.experimental import pallas as pl
from jax.experimental.pallas import tpu as pltpu

# Keep XLA (reference-side) matmuls in exact f32 so the 1e-5 comparison against the
# exact-f32 Pallas kernel is meaningful (TPU DEFAULT precision may use bf16 passes).
jax.config.update("jax_default_matmul_precision", "highest")


def _attention_kernel(xm_ref, wqkv_ref, bq_ref, bkv_ref, wo_ref, bo_ref,
                      out_ref, amap_ref, *, B, S, T, D):
    nq = B * S

    # One fused projection: rows [x ; mem] (B*(S+T), D) x [Wq^T*scale | Wk^T | Wv^T] (D, 3D).
    # The q/kv row boundary nq (=16) is a multiple of 8, so row slices are sublane-aligned.
    proj = jnp.dot(xm_ref[...], wqkv_ref[...], preferred_element_type=jnp.float32)

    q3 = (proj[:nq, :D] + bq_ref[...]).reshape(B, S, D)
    kv2 = proj[nq:, D:] + bkv_ref[...]
    # NOTE: the lane-offset slices below (offsets 32/64 < 128) lower to intra-vreg
    # shifts — cheap at D=32.  For production D, put the K/V split on a multiple of
    # 128 lanes so the slice is a pure view.
    k3 = kv2[:, :D].reshape(B, T, D)
    v3 = kv2[:, D:].reshape(B, T, D)

    # Batched scores over all B at once (contract last dims; no explicit transpose of k).
    scores = jnp.einsum("bsd,btd->bst", q3, k3, preferred_element_type=jnp.float32)
    scores = scores - jnp.max(scores, axis=-1, keepdims=True)
    e = jnp.exp(scores)
    # Exact normalization: kernel is not VALU-bound, so the approx EUP reciprocal would
    # only cost accuracy on a user-visible output.
    amap3 = e / jnp.sum(e, axis=-1, keepdims=True)

    # Single full-slab 2-D store of the attention map (no per-batch masked sub-stores).
    amap_ref[...] = amap3.reshape(nq, T).astype(amap_ref.dtype)

    # Batched context, then output projection + tanh over all rows at once.
    ctx2 = jnp.einsum("bst,btd->bsd", amap3, v3,
                      preferred_element_type=jnp.float32).reshape(nq, D)
    out2 = jnp.dot(ctx2, wo_ref[...], preferred_element_type=jnp.float32) + bo_ref[...]
    out_ref[...] = jnp.tanh(out2).astype(out_ref.dtype)


def prepare_params(params, dim):
    """One-time param prep (hoisted out of the forward path): fused QKV weight with the
    1/sqrt(D) scale folded into the query columns, plus transposed output weight."""
    scale = 1.0 / math.sqrt(dim)
    w_qkv = jnp.concatenate(
        [params["wq"].T * scale, params["wk"].T, params["wv"].T], axis=1)  # (D, 3D)
    return {
        "w_qkv": w_qkv.astype(jnp.float32),
        "b_q": (params["bq"] * scale).reshape(1, dim).astype(jnp.float32),
        "b_kv": jnp.concatenate([params["bk"], params["bv"]]).reshape(1, 2 * dim)
                   .astype(jnp.float32),
        "wo_t": params["wo"].T.astype(jnp.float32),
        "bo": params["bo"].reshape(1, dim).astype(jnp.float32),
    }


@jax.jit
def attention_forward(x, mem, prepared):
    """x: (B, S, D), mem: (B, T, D). Returns (output (B,S,D), attention_map (B,S,T))."""
    B, S, D = x.shape
    T = mem.shape[1]
    nq, nkv = B * S, B * T

    # Free reshapes + one tiny stacked-row concat (fused under jit) so the kernel does a
    # single projection matmul instead of two.
    xm2 = jnp.concatenate([x.reshape(nq, D), mem.reshape(nkv, D)], axis=0)

    flops = (2 * (nq + nkv) * D * 3 * D      # fused qkv projection
             + 4 * B * S * T * D             # scores + context
             + 2 * nq * D * D)               # output projection
    transcendentals = B * S * T + nq * D     # exp + tanh
    bytes_accessed = 4 * ((nq + nkv) * D     # stacked activations in
                          + 3 * D * D + D * D + 6 * D   # weights / biases
                          + nq * D + nq * T)            # outputs

    vmem = pl.BlockSpec(memory_space=pltpu.MemorySpace.VMEM)

    out2, amap2 = pl.pallas_call(
        functools.partial(_attention_kernel, B=B, S=S, T=T, D=D),
        out_shape=(
            jax.ShapeDtypeStruct((nq, D), jnp.float32),
            jax.ShapeDtypeStruct((nq, T), jnp.float32),
        ),
        in_specs=[vmem, vmem, vmem, vmem, vmem, vmem],
        out_specs=(vmem, vmem),
        cost_estimate=pl.CostEstimate(flops=flops,
                                      transcendentals=transcendentals,
                                      bytes_accessed=bytes_accessed),
    )(xm2, prepared["w_qkv"], prepared["b_q"], prepared["b_kv"],
      prepared["wo_t"], prepared["bo"])

    return out2.reshape(B, S, D), amap2.reshape(B, S, T)


def init_params(key, dim):
    """Deterministic init matching the module's shapes.
    Linear weights: xavier_uniform (bound = sqrt(6 / (fan_in + fan_out))).
    Biases: default nn.Linear init, uniform(-1/sqrt(fan_in), 1/sqrt(fan_in))."""
    ks = jax.random.split(key, 8)
    xbound = math.sqrt(6.0 / (dim + dim))
    bbound = 1.0 / math.sqrt(dim)
    u = lambda k, shape, bnd: jax.random.uniform(k, shape, jnp.float32, -bnd, bnd)
    # NOTE: conv / bn / pool / cat_linear params exist in the PyTorch module but are
    # only used when output_mode == 'concat' (default '' skips them entirely).
    return {
        "wq": u(ks[0], (dim, dim), xbound), "bq": u(ks[1], (dim,), bbound),
        "wk": u(ks[2], (dim, dim), xbound), "bk": u(ks[3], (dim,), bbound),
        "wv": u(ks[4], (dim, dim), xbound), "bv": u(ks[5], (dim,), bbound),
        "wo": u(ks[6], (dim, dim), xbound), "bo": u(ks[7], (dim,), bbound),
    }


def reference_forward(x, mem, params):
    scale = 1.0 / math.sqrt(x.shape[-1])
    q = x @ params["wq"].T + params["bq"]
    k = mem @ params["wk"].T + params["bk"]
    v = mem @ params["wv"].T + params["bv"]
    amap = jax.nn.softmax(jnp.einsum("bsd,btd->bst", q, k) * scale, axis=-1)
    out = jnp.einsum("bst,btd->bsd", amap, v)
    out = jnp.tanh(out @ params["wo"].T + params["bo"])
    return out, amap


if __name__ == "__main__":
    B, S, T, D = 2, 8, 8, 32  # batch, output_size, queried_size, dimension

    key = jax.random.PRNGKey(0)
    k_x, k_m, k_p = jax.random.split(key, 3)
    x = jax.random.normal(k_x, (B, S, D), dtype=jnp.float32)     # input
    mem = jax.random.normal(k_m, (B, T, D), dtype=jnp.float32)   # memory
    params = init_params(k_p, D)
    prepared = prepare_params(params, D)  # one-time transpose / fuse / scale fold

    out, amap = attention_forward(x, mem, prepared)
    jax.block_until_ready((out, amap))

    out_ref, amap_ref = reference_forward(x, mem, params)
    assert out.shape == (B, S, D) and amap.shape == (B, S, T)
    # Exact softmax normalization + exact-f32 matmuls on both sides: tight tolerance.
    assert jnp.allclose(amap, amap_ref, atol=1e-5, rtol=1e-5), \
        float(jnp.max(jnp.abs(amap - amap_ref)))
    assert jnp.allclose(out, out_ref, atol=1e-5, rtol=1e-5), \
        float(jnp.max(jnp.abs(out - out_ref)))

    # TODO(synk): output_mode='concat' branch (Conv1d groups=2 + BatchNorm1d +
    # AdaptiveAvgPool1d + cat_linear), output_mode='add', and the masking branches are
    # not exercised by the module's default kwargs and are not implemented here.
    print("KERNEL_OK")
</pallas_src>

<mosaic_0001>
module attributes {stable_mosaic.version = 11 : i64} {
  func.func @_attention_kernel(%arg0: memref<32x32xf32, #tpu.memory_space<vmem>>, %arg1: memref<32x96xf32, #tpu.memory_space<vmem>>, %arg2: memref<1x32xf32, #tpu.memory_space<vmem>>, %arg3: memref<1x64xf32, #tpu.memory_space<vmem>>, %arg4: memref<32x32xf32, #tpu.memory_space<vmem>>, %arg5: memref<1x32xf32, #tpu.memory_space<vmem>>, %arg6: memref<16x32xf32, #tpu.memory_space<vmem>>, %arg7: memref<16x8xf32, #tpu.memory_space<vmem>>) attributes {dimension_semantics = [], scalar_prefetch = 0 : i64, scratch_operands = 0 : i64, tpu.core_type = #tpu.core_type<tc>} {
    %c0 = arith.constant 0 : index
    %c0_0 = arith.constant 0 : index
    %0 = vector.load %arg0[%c0, %c0_0] : memref<32x32xf32, #tpu.memory_space<vmem>>, vector<32x32xf32>
    %c0_1 = arith.constant 0 : index
    %c0_2 = arith.constant 0 : index
    %1 = vector.load %arg1[%c0_1, %c0_2] : memref<32x96xf32, #tpu.memory_space<vmem>>, vector<32x96xf32>
    %cst = arith.constant dense<0.000000e+00> : vector<32x96xf32>
    %2 = tpu.matmul %0, %1, %cst {dimension_numbers = #tpu.dot_dimension_numbers<[1], [0], [0], [1], [0, 0, 1, 1], [], []>, precision = #tpu.contract_precision<fp32>} : vector<32x32xf32>, vector<32x96xf32>, vector<32x96xf32> -> vector<32x96xf32>
    %3 = vector.extract_strided_slice %2 {offsets = [0, 0], sizes = [16, 32], strides = [1, 1]} : vector<32x96xf32> to vector<16x32xf32>
    %c0_3 = arith.constant 0 : index
    %c0_4 = arith.constant 0 : index
    %4 = vector.load %arg2[%c0_3, %c0_4] : memref<1x32xf32, #tpu.memory_space<vmem>>, vector<1x32xf32>
    %5 = vector.broadcast %4 : vector<1x32xf32> to vector<16x32xf32>
    %6 = arith.addf %3, %5 : vector<16x32xf32>
    %7 = vector.shape_cast %6 : vector<16x32xf32> to vector<2x8x32xf32>
    %8 = vector.extract_strided_slice %2 {offsets = [16, 32], sizes = [16, 64], strides = [1, 1]} : vector<32x96xf32> to vector<16x64xf32>
    %c0_5 = arith.constant 0 : index
    %c0_6 = arith.constant 0 : index
    %9 = vector.load %arg3[%c0_5, %c0_6] : memref<1x64xf32, #tpu.memory_space<vmem>>, vector<1x64xf32>
    %10 = vector.broadcast %9 : vector<1x64xf32> to vector<16x64xf32>
    %11 = arith.addf %8, %10 : vector<16x64xf32>
    %12 = vector.extract_strided_slice %11 {offsets = [0, 0], sizes = [16, 32], strides = [1, 1]} : vector<16x64xf32> to vector<16x32xf32>
    %13 = vector.shape_cast %12 : vector<16x32xf32> to vector<2x8x32xf32>
    %14 = vector.extract_strided_slice %11 {offsets = [0, 32], sizes = [16, 32], strides = [1, 1]} : vector<16x64xf32> to vector<16x32xf32>
    %15 = vector.shape_cast %14 : vector<16x32xf32> to vector<2x8x32xf32>
    "tpu.trace_start"() <{level = 10 : i32, message = "bsd,btd->bst"}> : () -> ()
    %cst_7 = arith.constant dense<0.000000e+00> : vector<2x8x8xf32>
    %16 = tpu.matmul %7, %13, %cst_7 {dimension_numbers = #tpu.dot_dimension_numbers<[2], [2], [1], [1], [0, 0, 0, 1, 1, 1], [0], [0]>, precision = #tpu.contract_precision<fp32>} : vector<2x8x32xf32>, vector<2x8x32xf32>, vector<2x8x8xf32> -> vector<2x8x8xf32>
    "tpu.trace_stop"() : () -> ()
    %cst_8 = arith.constant dense<0xFF800000> : vector<2x8xf32>
    %17 = vector.multi_reduction <maximumf>, %16, %cst_8 [2] : vector<2x8x8xf32> to vector<2x8xf32>
    %18 = vector.shape_cast %17 : vector<2x8xf32> to vector<2x8x1xf32>
    %19 = vector.broadcast %18 : vector<2x8x1xf32> to vector<2x8x8xf32>
    %20 = arith.subf %16, %19 : vector<2x8x8xf32>
    %21 = math.exp %20 : vector<2x8x8xf32>
    %cst_9 = arith.constant dense<0.000000e+00> : vector<2x8xf32>
    %22 = vector.multi_reduction <add>, %21, %cst_9 [2] : vector<2x8x8xf32> to vector<2x8xf32>
    %23 = vector.shape_cast %22 : vector<2x8xf32> to vector<2x8x1xf32>
    %24 = vector.broadcast %23 : vector<2x8x1xf32> to vector<2x8x8xf32>
    %25 = arith.divf %21, %24 : vector<2x8x8xf32>
    %26 = vector.shape_cast %25 : vector<2x8x8xf32> to vector<16x8xf32>
    %c0_10 = arith.constant 0 : index
    %c0_11 = arith.constant 0 : index
    %27 = vector.load %arg7[%c0_10, %c0_11] : memref<16x8xf32, #tpu.memory_space<vmem>>, vector<16x8xf32>
    tpu.vector_store %arg7[%c0_10, %c0_11], %26 {strides = array<i32>} : memref<16x8xf32, #tpu.memory_space<vmem>>, vector<16x8xf32>,
    "tpu.trace_start"() <{level = 10 : i32, message = "bst,btd->bsd"}> : () -> ()
    %cst_12 = arith.constant dense<0.000000e+00> : vector<2x8x32xf32>
    %28 = tpu.matmul %25, %15, %cst_12 {dimension_numbers = #tpu.dot_dimension_numbers<[2], [1], [1], [2], [0, 0, 0, 1, 1, 2], [0], [0]>, precision = #tpu.contract_precision<fp32>} : vector<2x8x8xf32>, vector<2x8x32xf32>, vector<2x8x32xf32> -> vector<2x8x32xf32>
    "tpu.trace_stop"() : () -> ()
    %29 = vector.shape_cast %28 : vector<2x8x32xf32> to vector<16x32xf32>
    %c0_13 = arith.constant 0 : index
    %c0_14 = arith.constant 0 : index
    %30 = vector.load %arg4[%c0_13, %c0_14] : memref<32x32xf32, #tpu.memory_space<vmem>>, vector<32x32xf32>
    %cst_15 = arith.constant dense<0.000000e+00> : vector<16x32xf32>
    %31 = tpu.matmul %29, %30, %cst_15 {dimension_numbers = #tpu.dot_dimension_numbers<[1], [0], [0], [1], [0, 0, 1, 1], [], []>, precision = #tpu.contract_precision<fp32>} : vector<16x32xf32>, vector<32x32xf32>, vector<16x32xf32> -> vector<16x32xf32>
    %c0_16 = arith.constant 0 : index
    %c0_17 = arith.constant 0 : index
    %32 = vector.load %arg5[%c0_16, %c0_17] : memref<1x32xf32, #tpu.memory_space<vmem>>, vector<1x32xf32>
    %33 = vector.broadcast %32 : vector<1x32xf32> to vector<16x32xf32>
    %34 = arith.addf %31, %33 : vector<16x32xf32>
    %35 = math.tanh %34 : vector<16x32xf32>
    %c0_18 = arith.constant 0 : index
    %c0_19 = arith.constant 0 : index
    %36 = vector.load %arg6[%c0_18, %c0_19] : memref<16x32xf32, #tpu.memory_space<vmem>>, vector<16x32xf32>
    tpu.vector_store %arg6[%c0_18, %c0_19], %35 {strides = array<i32>} : memref<16x32xf32, #tpu.memory_space<vmem>>, vector<16x32xf32>,
    return
  }
}

</mosaic_0001>

<llo_original>
// kernel: attention_forward.1
$region0: #{attention_forward.1}
  #allocation0 [shape = 'u32[]', space=smem, size = 0x4, offset = 0x4, fixed_abs, tag = 'smem constant byte address 0x4 - core index']
  #allocation1 [shape = 'u32[144,128]{1,0:T(1,128)}', space=vmem, size = 0x12000, scoped, tag = 'internal scratch']
  %s0 = inlined_call_operand.vmem [shape: f32[32,32], index: 0, kind: input, shape index: {}]
  %s1 = inlined_call_operand.vmem [shape: f32[32,96], index: 1, kind: input, shape index: {}]
  %s2 = inlined_call_operand.vmem [shape: f32[1,32], index: 2, kind: input, shape index: {}]
  %s3 = inlined_call_operand.vmem [shape: f32[1,64], index: 3, kind: input, shape index: {}]
  %s4 = inlined_call_operand.vmem [shape: f32[32,32], index: 4, kind: input, shape index: {}]
  %s5 = inlined_call_operand.vmem [shape: f32[1,32], index: 5, kind: input, shape index: {}]
  %s6 = inlined_call_operand.hbm [shape: f32[16,32], index: 6, kind: output, shape index: {0}]
  %s7 = inlined_call_operand.hbm [shape: f32[16,8], index: 7, kind: output, shape index: {1}]
  %8 = xla_tuple %s6, %s7
  %s9 = sld [smem:[#allocation0]]
  $region42: #{attention_forward.1} parent=0
    _
  %s11 = ssub.s32 1, %s9
  %s12 = scalar_select 0, %s11, %s9
  $region1: #{attention_forward.1} parent=0
    #allocation2 [shape = 'u8[8192]{0}', space=vmem, size = 0x2000, scoped, tag = 'output window, operand 0, single buffered']
    #allocation3 [shape = 's32[1]{0}', space=sflag, size = 0x4, scoped, tag = 'scoped memory for attention_forward.1']
    #allocation4 [shape = 'u8[8192]{0}', space=vmem, size = 0x2000, scoped, tag = 'output window, operand 1, single buffered']
    #allocation5 [shape = 's32[1]{0}', space=sflag, size = 0x4, scoped, tag = 'scoped memory for attention_forward.1']
    %13 = vsyncpa [#allocation3], 0
    %14 = vsyncpa [#allocation5], 0
    // Predicated region
    $region2: #{attention_forward.1} parent=1 // pred_check
      _
    $region3: #{attention_forward.1} parent=1 // pred_check_branch
      %16 = sbr.rel (0) target = $region5
    $region4: #{attention_forward.1} parent=1 // pred_region
      _
    $region5: #{attention_forward.1} parent=1 // pred_fallthru
      _
    // Predicated region
    $region6: #{attention_forward.1} parent=1 // pred_check
      _
    $region7: #{attention_forward.1} parent=1 // pred_check_branch
      %18 = sbr.rel (0) target = $region9
    $region8: #{attention_forward.1} parent=1 // pred_region
      _
    $region9: #{attention_forward.1} parent=1 // pred_fallthru
      _
    // Predicated region
    $region10: #{attention_forward.1} parent=1 // pred_check
      _
    $region11: #{attention_forward.1} parent=1 // pred_check_branch
      %20 = sbr.rel (0) target = $region13
    $region12: #{attention_forward.1} parent=1 // pred_region
      _
    $region13: #{attention_forward.1} parent=1 // pred_fallthru
      _
    // Predicated region
    $region14: #{attention_forward.1} parent=1 // pred_check
      _
    $region15: #{attention_forward.1} parent=1 // pred_check_branch
      %22 = sbr.rel (0) target = $region17
    $region16: #{attention_forward.1} parent=1 // pred_region
      _
    $region17: #{attention_forward.1} parent=1 // pred_fallthru
      _
    // Predicated region
    $region18: #{attention_forward.1} parent=1 // pred_check
      _
    $region19: #{attention_forward.1} parent=1 // pred_check_branch
      %24 = sbr.rel (0) target = $region21
    $region20: #{attention_forward.1} parent=1 // pred_region
      _
    $region21: #{attention_forward.1} parent=1 // pred_fallthru
      _
    // Predicated region
    $region22: #{attention_forward.1} parent=1 // pred_check
      _
    $region23: #{attention_forward.1} parent=1 // pred_check_branch
      %26 = sbr.rel (0) target = $region25
    $region24: #{attention_forward.1} parent=1 // pred_region
      _
    $region25: #{attention_forward.1} parent=1 // pred_fallthru
      _
    %v27 = vld [vmem:[%s0] sm:$0xff]
    %v28 = vld [vmem:[%s0 + $0x8] sm:$0xff]
    %v29 = vld [vmem:[%s0 + $0x10] sm:$0xff]
    %v30 = vld [vmem:[%s0 + $0x18] sm:$0xff]
    %v31 = vld [vmem:[%s1] sm:$0xff]
    %v32 = vld [vmem:[%s1 + $0x8] sm:$0xff]
    %v33 = vld [vmem:[%s1 + $0x10] sm:$0xff]
    %v34 = vld [vmem:[%s1 + $0x18] sm:$0xff]
    %vm35 = vcmask 261120
    %v37 = vsel %vm35, %v27, 0
    %v40 = vsel %vm35, %v28, 0
    %v43 = vsel %vm35, %v29, 0
    %v46 = vsel %vm35, %v30, 0
    %48 = vmatprep.subr.mxu0 0.0
    %v49 = vand.u32 %v31, 4294901760
    %50 = vmatpush1.msra.mxu0 %v49
    %51 = vmatprep.subr.mxu0 0.0
    %v52 = vand.u32 %v32, 4294901760
    %53 = vmatpush1.msra.mxu0 %v52
    %54 = vmatprep.subr.mxu0 0.0
    %v55 = vand.u32 %v33, 4294901760
    %56 = vmatpush1.msra.mxu0 %v55
    %57 = vmatprep.subr.mxu0 0.0
    %v58 = vand.u32 %v34, 4294901760
    %59 = vmatpush1.msra.mxu0 %v58
    %60 = vmatprep.subr.mxu0 0.0
    %61 = vmatpush1.msra.mxu0 0.0
    %62 = vmatprep.subr.mxu0 0.0
    %63 = vmatpush1.msra.mxu0 0.0
    %64 = vmatprep.subr.mxu0 0.0
    %65 = vmatpush1.msra.mxu0 0.0
    %66 = vmatprep.subr.mxu0 0.0
    %67 = vmatpush1.msra.mxu0 0.0
    %68 = vmatprep.subr.mxu0 0.0
    %69 = vmatpush1.msra.mxu0 0.0
    %70 = vmatprep.subr.mxu0 0.0
    %71 = vmatpush1.msra.mxu0 0.0
    %72 = vmatprep.subr.mxu0 0.0
    %73 = vmatpush1.msra.mxu0 0.0
    %74 = vmatprep.subr.mxu0 0.0
    %75 = vmatpush1.msra.mxu0 0.0
    %76 = vmatprep.subr.mxu0 0.0
    %77 = vmatpush1.msra.mxu0 0.0
    %78 = vmatprep.subr.mxu0 0.0
    %79 = vmatpush1.msra.mxu0 0.0
    %80 = vmatprep.subr.mxu0 0.0
    %81 = vmatpush1.msra.mxu0 0.0
    %82 = vmatprep.subr.mxu0 0.0
    %83 = vmatpush1.msra.mxu0 0.0
    %84 = vmatprep.subr.mxu0 0.0
    %85 = vmatpush1.msra.mxu0 0.0
    %86 = vmatprep.subr.mxu0 0.0
    %87 = vmatpush1.msra.mxu0 0.0
    %88 = vmatprep.subr.mxu0 0.0
    %89 = vmatpush1.msra.mxu0 0.0
    %90 = vmatprep.subr.mxu0 0.0
    %91 = vmatpush1.msra.mxu0 0.0
    %92 = vmatprep.subr.mxu0 0.0
    %93 = vmatpush1.msra.mxu0 0.0
    %94 = vmatprep.subr.mxu0 0.0
    %95 = vmatpush1.msra.mxu0 0.0
    %96 = vmatprep.subr.mxu0 0.0
    %97 = vmatpush1.msra.mxu0 0.0
    %98 = vmatprep.subr.mxu0 0.0
    %99 = vmatpush1.msra.mxu0 0.0
    %100 = vmatprep.subr.mxu0 0.0
    %101 = vmatpush1.msra.mxu0 0.0
    %102 = vmatprep.subr.mxu0 0.0
    %103 = vmatpush1.msra.mxu0 0.0
    %104 = vmatprep.subr.mxu0 0.0
    %105 = vmatpush1.msra.mxu0 0.0
    %106 = vmatprep.subr.mxu0 0.0
    %107 = vmatpush1.msra.mxu0 0.0
    %108 = vmatprep.subr.mxu0 0.0
    %109 = vmatpush1.msra.mxu0 0.0
    %110 = vmatprep.subr.mxu0 0.0
    %111 = vmatpush1.msra.mxu0 0.0
    %112 = vmatprep.subr.mxu0 0.0
    %113 = vmatpush1.msra.mxu0 0.0
    %114 = vmatprep.subr.mxu0 0.0
    %115 = vmatpush1.msra.mxu0 0.0
    %116 = vmatprep.mubr.f32.mxu0 0.0
    %v117 = vand.u32 %v37, 4294901760
    %v118 = vsub.f32 %v37, %v117
    %v119 = vand.u32 %v118, 4294901760
    %v120 = vsub.f32 %v118, %v119
    %v121 = vand.u32 %v120, 4294901760
    %122 = vmatmul.mubr.f32.gmra.mrb[0].mxu0 %v121
    %v123 = vpop.f32.mrb[0].mxu0
    %v124 = vadd.f32 0.0, %v123
    %v125 = vpop.f32.mrb[0].mxu0
    %126 = vmatprep.mubr.f32.mxu0 0.0
    %v127 = vand.u32 %v40, 4294901760
    %v128 = vsub.f32 %v40, %v127
    %v129 = vand.u32 %v128, 4294901760
    %v130 = vsub.f32 %v128, %v129
    %v131 = vand.u32 %v130, 4294901760
    %132 = vmatmul.mubr.f32.gmra.mrb[0].mxu0 %v131
    %v133 = vpop.f32.mrb[0].mxu0
    %v134 = vadd.f32 0.0, %v133
    %v135 = vpop.f32.mrb[0].mxu0
    %136 = vmatprep.mubr.f32.mxu0 0.0
    %v137 = vand.u32 %v43, 4294901760
    %v138 = vsub.f32 %v43, %v137
    %v139 = vand.u32 %v138, 4294901760
    %v140 = vsub.f32 %v138, %v139
    %v141 = vand.u32 %v140, 4294901760
    %142 = vmatmul.mubr.f32.gmra.mrb[0].mxu0 %v141
    %v143 = vpop.f32.mrb[0].mxu0
    %v144 = vadd.f32 0.0, %v143
    %v145 = vpop.f32.mrb[0].mxu0
    %146 = vmatprep.mubr.f32.mxu0 0.0
    %v147 = vand.u32 %v46, 4294901760
    %v148 = vsub.f32 %v46, %v147
    %v149 = vand.u32 %v148, 4294901760
    %v150 = vsub.f32 %v148, %v149
    %v151 = vand.u32 %v150, 4294901760
    %152 = vmatmul.mubr.f32.gmra.mrb[0].mxu0 %v151
    %v153 = vpop.f32.mrb[0].mxu0
    %v154 = vadd.f32 0.0, %v153
    %v155 = vpop.f32.mrb[0].mxu0
    %156 = vdwg.mxu0
    %157 = vmatprep.subr.mxu0 0.0
    %v158 = vand.u32 %v31, 4294901760
    %v159 = vsub.f32 %v31, %v158
    %v160 = vand.u32 %v159, 4294901760
    %v161 = vsub.f32 %v159, %v160
    %v162 = vand.u32 %v161, 4294901760
    %163 = vmatpush1.msra.mxu0 %v162
    %164 = vmatprep.subr.mxu0 0.0
    %v165 = vand.u32 %v32, 4294901760
    %v166 = vsub.f32 %v32, %v165
    %v167 = vand.u32 %v166, 4294901760
    %v168 = vsub.f32 %v166, %v167
    %v169 = vand.u32 %v168, 4294901760
    %170 = vmatpush1.msra.mxu0 %v169
    %171 = vmatprep.subr.mxu0 0.0
    %v172 = vand.u32 %v33, 4294901760
    %v173 = vsub.f32 %v33, %v172
    %v174 = vand.u32 %v173, 4294901760
    %v175 = vsub.f32 %v173, %v174
    %v176 = vand.u32 %v175, 4294901760
    %177 = vmatpush1.msra.mxu0 %v176
    %178 = vmatprep.subr.mxu0 0.0
    %v179 = vand.u32 %v34, 4294901760
    %v180 = vsub.f32 %v34, %v179
    %v181 = vand.u32 %v180, 4294901760
    %v182 = vsub.f32 %v180, %v181
    %v183 = vand.u32 %v182, 4294901760
    %184 = vmatpush1.msra.mxu0 %v183
    %185 = vmatprep.subr.mxu0 0.0
    %186 = vmatpush1.msra.mxu0 0.0
    %187 = vmatprep.subr.mxu0 0.0
    %188 = vmatpush1.msra.mxu0 0.0
    %189 = vmatprep.subr.mxu0 0.0
    %190 = vmatpush1.msra.mxu0 0.0
    %191 = vmatprep.subr.mxu0 0.0
    %192 = vmatpush1.msra.mxu0 0.0
    %193 = vmatprep.subr.mxu0 0.0
    %194 = vmatpush1.msra.mxu0 0.0
    %195 = vmatprep.subr.mxu0 0.0
    %196 = vmatpush1.msra.mxu0 0.0
    %197 = vmatprep.subr.mxu0 0.0
    %198 = vmatpush1.msra.mxu0 0.0
    %199 = vmatprep.subr.mxu0 0.0
    %200 = vmatpush1.msra.mxu0 0.0
    %201 = vmatprep.subr.mxu0 0.0
    %202 = vmatpush1.msra.mxu0 0.0
    %203 = vmatprep.subr.mxu0 0.0
    %204 = vmatpush1.msra.mxu0 0.0
    %205 = vmatprep.subr.mxu0 0.0
    %206 = vmatpush1.msra.mxu0 0.0
    %207 = vmatprep.subr.mxu0 0.0
    %208 = vmatpush1.msra.mxu0 0.0
    %209 = vmatprep.subr.mxu0 0.0
    %210 = vmatpush1.msra.mxu0 0.0
    %211 = vmatprep.subr.mxu0 0.0
    %212 = vmatpush1.msra.mxu0 0.0
    %213 = vmatprep.subr.mxu0 0.0
    %214 = vmatpush1.msra.mxu0 0.0
    %215 = vmatprep.subr.mxu0 0.0
    %216 = vmatpush1.msra.mxu0 0.0
    %217 = vmatprep.subr.mxu0 0.0
    %218 = vmatpush1.msra.mxu0 0.0
    %219 = vmatprep.subr.mxu0 0.0
    %220 = vmatpush1.msra.mxu0 0.0
    %221 = vmatprep.subr.mxu0 0.0
    %222 = vmatpush1.msra.mxu0 0.0
    %223 = vmatprep.subr.mxu0 0.0
    %224 = vmatpush1.msra.mxu0 0.0
    %225 = vmatprep.subr.mxu0 0.0
    %226 = vmatpush1.msra.mxu0 0.0
    %227 = vmatprep.subr.mxu0 0.0
    %228 = vmatpush1.msra.mxu0 0.0
    %229 = vmatprep.subr.mxu0 0.0
    %230 = vmatpush1.msra.mxu0 0.0
    %231 = vmatprep.subr.mxu0 0.0
    %232 = vmatpush1.msra.mxu0 0.0
    %233 = vmatprep.subr.mxu0 0.0
    %234 = vmatpush1.msra.mxu0 0.0
    %235 = vmatprep.subr.mxu0 0.0
    %236 = vmatpush1.msra.mxu0 0.0
    %237 = vmatprep.subr.mxu0 0.0
    %238 = vmatpush1.msra.mxu0 0.0
    %239 = vmatprep.subr.mxu0 0.0
    %240 = vmatpush1.msra.mxu0 0.0
    %241 = vmatprep.mubr.f32.mxu0 0.0
    %v242 = vand.u32 %v37, 4294901760
    %243 = vmatmul.mubr.f32.gmra.mrb[0].mxu0 %v242
    %v244 = vpop.f32.mrb[0].mxu0
    %v245 = vadd.f32 %v124, %v244
    %v246 = vpop.f32.mrb[0].mxu0
    %247 = vmatprep.mubr.f32.mxu0 0.0
    %v248 = vand.u32 %v40, 4294901760
    %249 = vmatmul.mubr.f32.gmra.mrb[0].mxu0 %v248
    %v250 = vpop.f32.mrb[0].mxu0
    %v251 = vadd.f32 %v134, %v250
    %v252 = vpop.f32.mrb[0].mxu0
    %253 = vmatprep.mubr.f32.mxu0 0.0
    %v254 = vand.u32 %v43, 4294901760
    %255 = vmatmul.mubr.f32.gmra.mrb[0].mxu0 %v254
    %v256 = vpop.f32.mrb[0].mxu0
    %v257 = vadd.f32 %v144, %v256
    %v258 = vpop.f32.mrb[0].mxu0
    %259 = vmatprep.mubr.f32.mxu0 0.0
    %v260 = vand.u32 %v46, 4294901760
    %261 = vmatmul.mubr.f32.gmra.mrb[0].mxu0 %v260
    %v262 = vpop.f32.mrb[0].mxu0
    %v263 = vadd.f32 %v154, %v262
    %v264 = vpop.f32.mrb[0].mxu0
    %265 = vdwg.mxu0
    %266 = vmatprep.subr.mxu0 0.0
    %v267 = vand.u32 %v31, 4294901760
    %v268 = vsub.f32 %v31, %v267
    %269 = vmatpush1.msra.mxu0 %v268
    %270 = vmatprep.subr.mxu0 0.0
    %v271 = vand.u32 %v32, 4294901760
    %v272 = vsub.f32 %v32, %v271
    %273 = vmatpush1.msra.mxu0 %v272
    %274 = vmatprep.subr.mxu0 0.0
    %v275 = vand.u32 %v33, 4294901760
    %v276 = vsub.f32 %v33, %v275
    %277 = vmatpush1.msra.mxu0 %v276
    %278 = vmatprep.subr.mxu0 0.0
    %v279 = vand.u32 %v34, 4294901760
    %v280 = vsub.f32 %v34, %v279
    %281 = vmatpush1.msra.mxu0 %v280
    %282 = vmatprep.subr.mxu0 0.0
    %283 = vmatpush1.msra.mxu0 0.0
    %284 = vmatprep.subr.mxu0 0.0
    %285 = vmatpush1.msra.mxu0 0.0
    %286 = vmatprep.subr.mxu0 0.0
    %287 = vmatpush1.msra.mxu0 0.0
    %288 = vmatprep.subr.mxu0 0.0
    %289 = vmatpush1.msra.mxu0 0.0
    %290 = vmatprep.subr.mxu0 0.0
    %291 = vmatpush1.msra.mxu0 0.0
    %292 = vmatprep.subr.mxu0 0.0
    %293 = vmatpush1.msra.mxu0 0.0
    %294 = vmatprep.subr.mxu0 0.0
    %295 = vmatpush1.msra.mxu0 0.0
    %296 = vmatprep.subr.mxu0 0.0
    %297 = vmatpush1.msra.mxu0 0.0
    %298 = vmatprep.subr.mxu0 0.0
    %299 = vmatpush1.msra.mxu0 0.0
    %300 = vmatprep.subr.mxu0 0.0
    %301 = vmatpush1.msra.mxu0 0.0
    %302 = vmatprep.subr.mxu0 0.0
    %303 = vmatpush1.msra.mxu0 0.0
    %304 = vmatprep.subr.mxu0 0.0
    %305 = vmatpush1.msra.mxu0 0.0
    %306 = vmatprep.subr.mxu0 0.0
    %307 = vmatpush1.msra.mxu0 0.0
    %308 = vmatprep.subr.mxu0 0.0
    %309 = vmatpush1.msra.mxu0 0.0
    %310 = vmatprep.subr.mxu0 0.0
    %311 = vmatpush1.msra.mxu0 0.0
    %312 = vmatprep.subr.mxu0 0.0
    %313 = vmatpush1.msra.mxu0 0.0
    %314 = vmatprep.subr.mxu0 0.0
    %315 = vmatpush1.msra.mxu0 0.0
    %316 = vmatprep.subr.mxu0 0.0
    %317 = vmatpush1.msra.mxu0 0.0
    %318 = vmatprep.subr.mxu0 0.0
    %319 = vmatpush1.msra.mxu0 0.0
    %320 = vmatprep.subr.mxu0 0.0
    %321 = vmatpush1.msra.mxu0 0.0
    %322 = vmatprep.subr.mxu0 0.0
    %323 = vmatpush1.msra.mxu0 0.0
    %324 = vmatprep.subr.mxu0 0.0
    %325 = vmatpush1.msra.mxu0 0.0
    %326 = vmatprep.subr.mxu0 0.0
    %327 = vmatpush1.msra.mxu0 0.0
    %328 = vmatprep.subr.mxu0 0.0
    %329 = vmatpush1.msra.mxu0 0.0
    %330 = vmatprep.subr.mxu0 0.0
    %331 = vmatpush1.msra.mxu0 0.0
    %332 = vmatprep.subr.mxu0 0.0
    %333 = vmatpush1.msra.mxu0 0.0
    %334 = vmatprep.subr.mxu0 0.0
    %335 = vmatpush1.msra.mxu0 0.0
    %336 = vmatprep.subr.mxu0 0.0
    %337 = vmatpush1.msra.mxu0 0.0
    %338 = vmatprep.mubr.f32.mxu0 0.0
    %v339 = vand.u32 %v37, 4294901760
    %v340 = vsub.f32 %v37, %v339
    %341 = vmatmul.mubr.f32.gmra.mrb[0].mxu0 %v340
    %v342 = vpop.f32.mrb[0].mxu0
    %v343 = vadd.f32 %v245, %v342
    %v344 = vpop.f32.mrb[0].mxu0
    %345 = vmatprep.mubr.f32.mxu0 0.0
    %v346 = vand.u32 %v40, 4294901760
    %v347 = vsub.f32 %v40, %v346
    %348 = vmatmul.mubr.f32.gmra.mrb[0].mxu0 %v347
    %v349 = vpop.f32.mrb[0].mxu0
    %v350 = vadd.f32 %v251, %v349
    %v351 = vpop.f32.mrb[0].mxu0
    %352 = vmatprep.mubr.f32.mxu0 0.0
    %v353 = vand.u32 %v43, 4294901760
    %v354 = vsub.f32 %v43, %v353
    %355 = vmatmul.mubr.f32.gmra.mrb[0].mxu0 %v354
    %v356 = vpop.f32.mrb[0].mxu0
    %v357 = vadd.f32 %v257, %v356
    %v358 = vpop.f32.mrb[0].mxu0
    %359 = vmatprep.mubr.f32.mxu0 0.0
    %v360 = vand.u32 %v46, 4294901760
    %v361 = vsub.f32 %v46, %v360
    %362 = vmatmul.mubr.f32.gmra.mrb[0].mxu0 %v361
    %v363 = vpop.f32.mrb[0].mxu0
    %v364 = vadd.f32 %v263, %v363
    %v365 = vpop.f32.mrb[0].mxu0
    %366 = vdwg.mxu0
    %367 = vmatprep.subr.mxu0 0.0
    %v368 = vand.u32 %v31, 4294901760
    %369 = vmatpush1.msra.mxu0 %v368
    %370 = vmatprep.subr.mxu0 0.0
    %v371 = vand.u32 %v32, 4294901760
    %372 = vmatpush1.msra.mxu0 %v371
    %373 = vmatprep.subr.mxu0 0.0
    %v374 = vand.u32 %v33, 4294901760
    %375 = vmatpush1.msra.mxu0 %v374
    %376 = vmatprep.subr.mxu0 0.0
    %v377 = vand.u32 %v34, 4294901760
    %378 = vmatpush1.msra.mxu0 %v377
    %379 = vmatprep.subr.mxu0 0.0
    %380 = vmatpush1.msra.mxu0 0.0
    %381 = vmatprep.subr.mxu0 0.0
    %382 = vmatpush1.msra.mxu0 0.0
    %383 = vmatprep.subr.mxu0 0.0
    %384 = vmatpush1.msra.mxu0 0.0
    %385 = vmatprep.subr.mxu0 0.0
    %386 = vmatpush1.msra.mxu0 0.0
    %387 = vmatprep.subr.mxu0 0.0
    %388 = vmatpush1.msra.mxu0 0.0
    %389 = vmatprep.subr.mxu0 0.0
    %390 = vmatpush1.msra.mxu0 0.0
    %391 = vmatprep.subr.mxu0 0.0
    %392 = vmatpush1.msra.mxu0 0.0
    %393 = vmatprep.subr.mxu0 0.0
    %394 = vmatpush1.msra.mxu0 0.0
    %395 = vmatprep.subr.mxu0 0.0
    %396 = vmatpush1.msra.mxu0 0.0
    %397 = vmatprep.subr.mxu0 0.0
    %398 = vmatpush1.msra.mxu0 0.0
    %399 = vmatprep.subr.mxu0 0.0
    %400 = vmatpush1.msra.mxu0 0.0
    %401 = vmatprep.subr.mxu0 0.0
    %402 = vmatpush1.msra.mxu0 0.0
    %403 = vmatprep.subr.mxu0 0.0
    %404 = vmatpush1.msra.mxu0 0.0
    %405 = vmatprep.subr.mxu0 0.0
    %406 = vmatpush1.msra.mxu0 0.0
    %407 = vmatprep.subr.mxu0 0.0
    %408 = vmatpush1.msra.mxu0 0.0
    %409 = vmatprep.subr.mxu0 0.0
    %410 = vmatpush1.msra.mxu0 0.0
    %411 = vmatprep.subr.mxu0 0.0
    %412 = vmatpush1.msra.mxu0 0.0
    %413 = vmatprep.subr.mxu0 0.0
    %414 = vmatpush1.msra.mxu0 0.0
    %415 = vmatprep.subr.mxu0 0.0
    %416 = vmatpush1.msra.mxu0 0.0
    %417 = vmatprep.subr.mxu0 0.0
    %418 = vmatpush1.msra.mxu0 0.0
    %419 = vmatprep.subr.mxu0 0.0
    %420 = vmatpush1.msra.mxu0 0.0
    %421 = vmatprep.subr.mxu0 0.0
    %422 = vmatpush1.msra.mxu0 0.0
    %423 = vmatprep.subr.mxu0 0.0
    %424 = vmatpush1.msra.mxu0 0.0
    %425 = vmatprep.subr.mxu0 0.0
    %426 = vmatpush1.msra.mxu0 0.0
    %427 = vmatprep.subr.mxu0 0.0
    %428 = vmatpush1.msra.mxu0 0.0
    %429 = vmatprep.subr.mxu0 0.0
    %430 = vmatpush1.msra.mxu0 0.0
    %431 = vmatprep.subr.mxu0 0.0
    %432 = vmatpush1.msra.mxu0 0.0
    %433 = vmatprep.subr.mxu0 0.0
    %434 = vmatpush1.msra.mxu0 0.0
    %435 = vmatprep.mubr.f32.mxu0 0.0
    %v436 = vand.u32 %v37, 4294901760
    %v437 = vsub.f32 %v37, %v436
    %v438 = vand.u32 %v437, 4294901760
    %439 = vmatmul.mubr.f32.gmra.mrb[0].mxu0 %v438
    %v440 = vpop.f32.mrb[0].mxu0
    %v441 = vadd.f32 %v343, %v440
    %v442 = vpop.f32.mrb[0].mxu0
    %443 = vmatprep.mubr.f32.mxu0 0.0
    %v444 = vand.u32 %v40, 4294901760
    %v445 = vsub.f32 %v40, %v444
    %v446 = vand.u32 %v445, 4294901760
    %447 = vmatmul.mubr.f32.gmra.mrb[0].mxu0 %v446
    %v448 = vpop.f32.mrb[0].mxu0
    %v449 = vadd.f32 %v350, %v448
    %v450 = vpop.f32.mrb[0].mxu0
    %451 = vmatprep.mubr.f32.mxu0 0.0
    %v452 = vand.u32 %v43, 4294901760
    %v453 = vsub.f32 %v43, %v452
    %v454 = vand.u32 %v453, 4294901760
    %455 = vmatmul.mubr.f32.gmra.mrb[0].mxu0 %v454
    %v456 = vpop.f32.mrb[0].mxu0
    %v457 = vadd.f32 %v357, %v456
    %v458 = vpop.f32.mrb[0].mxu0
    %459 = vmatprep.mubr.f32.mxu0 0.0
    %v460 = vand.u32 %v46, 4294901760
    %v461 = vsub.f32 %v46, %v460
    %v462 = vand.u32 %v461, 4294901760
    %463 = vmatmul.mubr.f32.gmra.mrb[0].mxu0 %v462
    %v464 = vpop.f32.mrb[0].mxu0
    %v465 = vadd.f32 %v364, %v464
    %v466 = vpop.f32.mrb[0].mxu0
    %467 = vdwg.mxu0
    %468 = vmatprep.subr.mxu0 0.0
    %v469 = vand.u32 %v31, 4294901760
    %v470 = vsub.f32 %v31, %v469
    %v471 = vand.u32 %v470, 4294901760
    %472 = vmatpush1.msra.mxu0 %v471
    %473 = vmatprep.subr.mxu0 0.0
    %v474 = vand.u32 %v32, 4294901760
    %v475 = vsub.f32 %v32, %v474
    %v476 = vand.u32 %v475, 4294901760
    %477 = vmatpush1.msra.mxu0 %v476
    %478 = vmatprep.subr.mxu0 0.0
    %v479 = vand.u32 %v33, 4294901760
    %v480 = vsub.f32 %v33, %v479
    %v481 = vand.u32 %v480, 4294901760
    %482 = vmatpush1.msra.mxu0 %v481
    %483 = vmatprep.subr.mxu0 0.0
    %v484 = vand.u32 %v34, 4294901760
    %v485 = vsub.f32 %v34, %v484
    %v486 = vand.u32 %v485, 4294901760
    %487 = vmatpush1.msra.mxu0 %v486
    %488 = vmatprep.subr.mxu0 0.0
    %489 = vmatpush1.msra.mxu0 0.0
    %490 = vmatprep.subr.mxu0 0.0
    %491 = vmatpush1.msra.mxu0 0.0
    %492 = vmatprep.subr.mxu0 0.0
    %493 = vmatpush1.msra.mxu0 0.0
    %494 = vmatprep.subr.mxu0 0.0
    %495 = vmatpush1.msra.mxu0 0.0
    %496 = vmatprep.subr.mxu0 0.0
    %497 = vmatpush1.msra.mxu0 0.0
    %498 = vmatprep.subr.mxu0 0.0
    %499 = vmatpush1.msra.mxu0 0.0
    %500 = vmatprep.subr.mxu0 0.0
    %501 = vmatpush1.msra.mxu0 0.0
    %502 = vmatprep.subr.mxu0 0.0
    %503 = vmatpush1.msra.mxu0 0.0
    %504 = vmatprep.subr.mxu0 0.0
    %505 = vmatpush1.msra.mxu0 0.0
    %506 = vmatprep.subr.mxu0 0.0
    %507 = vmatpush1.msra.mxu0 0.0
    %508 = vmatprep.subr.mxu0 0.0
    %509 = vmatpush1.msra.mxu0 0.0
    %510 = vmatprep.subr.mxu0 0.0
    %511 = vmatpush1.msra.mxu0 0.0
    %512 = vmatprep.subr.mxu0 0.0
    %513 = vmatpush1.msra.mxu0 0.0
    %514 = vmatprep.subr.mxu0 0.0
    %515 = vmatpush1.msra.mxu0 0.0
    %516 = vmatprep.subr.mxu0 0.0
    %517 = vmatpush1.msra.mxu0 0.0
    %518 = vmatprep.subr.mxu0 0.0
    %519 = vmatpush1.msra.mxu0 0.0
    %520 = vmatprep.subr.mxu0 0.0
    %521 = vmatpush1.msra.mxu0 0.0
    %522 = vmatprep.subr.mxu0 0.0
    %523 = vmatpush1.msra.mxu0 0.0
    %524 = vmatprep.subr.mxu0 0.0
    %525 = vmatpush1.msra.mxu0 0.0
    %526 = vmatprep.subr.mxu0 0.0
    %527 = vmatpush1.msra.mxu0 0.0
    %528 = vmatprep.subr.mxu0 0.0
    %529 = vmatpush1.msra.mxu0 0.0
    %530 = vmatprep.subr.mxu0 0.0
    %531 = vmatpush1.msra.mxu0 0.0
    %532 = vmatprep.subr.mxu0 0.0
    %533 = vmatpush1.msra.mxu0 0.0
    %534 = vmatprep.subr.mxu0 0.0
    %535 = vmatpush1.msra.mxu0 0.0
    %536 = vmatprep.subr.mxu0 0.0
    %537 = vmatpush1.msra.mxu0 0.0
    %538 = vmatprep.subr.mxu0 0.0
    %539 = vmatpush1.msra.mxu0 0.0
    %540 = vmatprep.subr.mxu0 0.0
    %541 = vmatpush1.msra.mxu0 0.0
    %542 = vmatprep.subr.mxu0 0.0
    %543 = vmatpush1.msra.mxu0 0.0
    %544 = vmatprep.mubr.f32.mxu0 0.0
    %v545 = vand.u32 %v37, 4294901760
    %546 = vmatmul.mubr.f32.gmra.mrb[0].mxu0 %v545
    %v547 = vpop.f32.mrb[0].mxu0
    %v548 = vadd.f32 %v441, %v547
    %v549 = vpop.f32.mrb[0].mxu0
    %550 = vmatprep.mubr.f32.mxu0 0.0
    %v551 = vand.u32 %v40, 4294901760
    %552 = vmatmul.mubr.f32.gmra.mrb[0].mxu0 %v551
    %v553 = vpop.f32.mrb[0].mxu0
    %v554 = vadd.f32 %v449, %v553
    %v555 = vpop.f32.mrb[0].mxu0
    %556 = vmatprep.mubr.f32.mxu0 0.0
    %v557 = vand.u32 %v43, 4294901760
    %558 = vmatmul.mubr.f32.gmra.mrb[0].mxu0 %v557
    %v559 = vpop.f32.mrb[0].mxu0
    %v560 = vadd.f32 %v457, %v559
    %v561 = vpop.f32.mrb[0].mxu0
    %562 = vmatprep.mubr.f32.mxu0 0.0
    %v563 = vand.u32 %v46, 4294901760
    %564 = vmatmul.mubr.f32.gmra.mrb[0].mxu0 %v563
    %v565 = vpop.f32.mrb[0].mxu0
    %v566 = vadd.f32 %v465, %v565
    %v567 = vpop.f32.mrb[0].mxu0
    %568 = vdwg.mxu0
    %569 = vmatprep.subr.mxu0 0.0
    %v570 = vand.u32 %v31, 4294901760
    %571 = vmatpush1.msra.mxu0 %v570
    %572 = vmatprep.subr.mxu0 0.0
    %v573 = vand.u32 %v32, 4294901760
    %574 = vmatpush1.msra.mxu0 %v573
    %575 = vmatprep.subr.mxu0 0.0
    %v576 = vand.u32 %v33, 4294901760
    %577 = vmatpush1.msra.mxu0 %v576
    %578 = vmatprep.subr.mxu0 0.0
    %v579 = vand.u32 %v34, 4294901760
    %580 = vmatpush1.msra.mxu0 %v579
    %581 = vmatprep.subr.mxu0 0.0
    %582 = vmatpush1.msra.mxu0 0.0
    %583 = vmatprep.subr.mxu0 0.0
    %584 = vmatpush1.msra.mxu0 0.0
    %585 = vmatprep.subr.mxu0 0.0
    %586 = vmatpush1.msra.mxu0 0.0
    %587 = vmatprep.subr.mxu0 0.0
    %588 = vmatpush1.msra.mxu0 0.0
    %589 = vmatprep.subr.mxu0 0.0
    %590 = vmatpush1.msra.mxu0 0.0
    %591 = vmatprep.subr.mxu0 0.0
    %592 = vmatpush1.msra.mxu0 0.0
    %593 = vmatprep.subr.mxu0 0.0
    %594 = vmatpush1.msra.mxu0 0.0
    %595 = vmatprep.subr.mxu0 0.0
    %596 = vmatpush1.msra.mxu0 0.0
    %597 = vmatprep.subr.mxu0 0.0
    %598 = vmatpush1.msra.mxu0 0.0
    %599 = vmatprep.subr.mxu0 0.0
    %600 = vmatpush1.msra.mxu0 0.0
    %601 = vmatprep.subr.mxu0 0.0
    %602 = vmatpush1.msra.mxu0 0.0
    %603 = vmatprep.subr.mxu0 0.0
    %604 = vmatpush1.msra.mxu0 0.0
    %605 = vmatprep.subr.mxu0 0.0
    %606 = vmatpush1.msra.mxu0 0.0
    %607 = vmatprep.subr.mxu0 0.0
    %608 = vmatpush1.msra.mxu0 0.0
    %609 = vmatprep.subr.mxu0 0.0
    %610 = vmatpush1.msra.mxu0 0.0
    %611 = vmatprep.subr.mxu0 0.0
    %612 = vmatpush1.msra.mxu0 0.0
    %613 = vmatprep.subr.mxu0 0.0
    %614 = vmatpush1.msra.mxu0 0.0
    %615 = vmatprep.subr.mxu0 0.0
    %616 = vmatpush1.msra.mxu0 0.0
    %617 = vmatprep.subr.mxu0 0.0
    %618 = vmatpush1.msra.mxu0 0.0
    %619 = vmatprep.subr.mxu0 0.0
    %620 = vmatpush1.msra.mxu0 0.0
    %621 = vmatprep.subr.mxu0 0.0
    %622 = vmatpush1.msra.mxu0 0.0
    %623 = vmatprep.subr.mxu0 0.0
    %624 = vmatpush1.msra.mxu0 0.0
    %625 = vmatprep.subr.mxu0 0.0
    %626 = vmatpush1.msra.mxu0 0.0
    %627 = vmatprep.subr.mxu0 0.0
    %628 = vmatpush1.msra.mxu0 0.0
    %629 = vmatprep.subr.mxu0 0.0
    %630 = vmatpush1.msra.mxu0 0.0
    %631 = vmatprep.subr.mxu0 0.0
    %632 = vmatpush1.msra.mxu0 0.0
    %633 = vmatprep.subr.mxu0 0.0
    %634 = vmatpush1.msra.mxu0 0.0
    %635 = vmatprep.subr.mxu0 0.0
    %636 = vmatpush1.msra.mxu0 0.0
    %637 = vmatprep.mubr.f32.mxu0 0.0
    %v638 = vand.u32 %v37, 4294901760
    %639 = vmatmul.mubr.f32.gmra.mrb[0].mxu0 %v638
    %v640 = vpop.f32.mrb[0].mxu0
    %v641 = vadd.f32 %v548, %v640
    %v642 = vpop.f32.mrb[0].mxu0
    %643 = vmatprep.mubr.f32.mxu0 0.0
    %v644 = vand.u32 %v40, 4294901760
    %645 = vmatmul.mubr.f32.gmra.mrb[0].mxu0 %v644
    %v646 = vpop.f32.mrb[0].mxu0
    %v647 = vadd.f32 %v554, %v646
    %v648 = vpop.f32.mrb[0].mxu0
    %649 = vmatprep.mubr.f32.mxu0 0.0
    %v650 = vand.u32 %v43, 4294901760
    %651 = vmatmul.mubr.f32.gmra.mrb[0].mxu0 %v650
    %v652 = vpop.f32.mrb[0].mxu0
    %v653 = vadd.f32 %v560, %v652
    %v654 = vpop.f32.mrb[0].mxu0
    %655 = vmatprep.mubr.f32.mxu0 0.0
    %v656 = vand.u32 %v46, 4294901760
    %657 = vmatmul.mubr.f32.gmra.mrb[0].mxu0 %v656
    %v658 = vpop.f32.mrb[0].mxu0
    %v659 = vadd.f32 %v566, %v658
    %v660 = vpop.f32.mrb[0].mxu0
    %661 = vdwg.mxu0
    %v662 = vld [vmem:[%s2] sm:$0x1]
    %v664 = vlaneseq
    %v665 = vshrl.u32 %v664, 7
    %v666 = vsub.s32 0, %v665
    %v667 = vrot.slane %v662, %v666
    %v669 = vadd.f32 %v641, %v667
    %v670 = vadd.f32 %v647, %v667
    %v671 = vld [vmem:[%s3] sm:$0x1]
    %v673 = vlaneseq
    %v674 = vshrl.u32 %v673, 7
    %v675 = vsub.s32 0, %v674
    %v676 = vrot.slane %v671, %v675
    %677 = vrot.lane.b32.xlu0 %v676, 32
    %v678 = vpop.permute.xlu0 %677
    %v680 = vadd.f32 %v653, %v678
    %v681 = vadd.f32 %v659, %v678
    %683 = vrot.lane.b32.xlu0 %v680, 96
    %v684 = vpop.permute.xlu0 %683
    %v686 = vsel %vm35, %v669, 0
    %v688 = vsel %vm35, %v684, 0
    %690 = vmatprep.subr.mxu0 0.0
    %v691 = vand.u32 %v688, 4294901760
    %692 = vmatpush1.xpose.msra.mxu0 %v691
    %693 = vmatprep.subr.mxu0 0.0
    %694 = vmatpush1.xpose.msra.mxu0 0.0
    %695 = vmatprep.subr.mxu0 0.0
    %696 = vmatpush1.xpose.msra.mxu0 0.0
    %697 = vmatprep.subr.mxu0 0.0
    %698 = vmatpush1.xpose.msra.mxu0 0.0
    %699 = vmatprep.subr.mxu0 0.0
    %700 = vmatpush1.xpose.msra.mxu0 0.0
    %701 = vmatprep.subr.mxu0 0.0
    %702 = vmatpush1.xpose.msra.mxu0 0.0
    %703 = vmatprep.subr.mxu0 0.0
    %704 = vmatpush1.xpose.msra.mxu0 0.0
    %705 = vmatprep.subr.mxu0 0.0
    %706 = vmatpush1.xpose.msra.mxu0 0.0
    %707 = vmatprep.subr.mxu0 0.0
    %708 = vmatpush1.xpose.msra.mxu0 0.0
    %709 = vmatprep.subr.mxu0 0.0
    %710 = vmatpush1.xpose.msra.mxu0 0.0
    %711 = vmatprep.subr.mxu0 0.0
    %712 = vmatpush1.xpose.msra.mxu0 0.0
    %713 = vmatprep.subr.mxu0 0.0
    %714 = vmatpush1.xpose.msra.mxu0 0.0
    %715 = vmatprep.subr.mxu0 0.0
    %716 = vmatpush1.xpose.msra.mxu0 0.0
    %717 = vmatprep.subr.mxu0 0.0
    %718 = vmatpush1.xpose.msra.mxu0 0.0
    %719 = vmatprep.subr.mxu0 0.0
    %720 = vmatpush1.xpose.msra.mxu0 0.0
    %721 = vmatprep.subr.mxu0 0.0
    %722 = vmatpush1.xpose.msra.mxu0 0.0
    %723 = vmatprep.subr.mxu0 0.0
    %724 = vmatpush1.xpose.msra.mxu0 0.0
    %725 = vmatprep.subr.mxu0 0.0
    %726 = vmatpush1.xpose.msra.mxu0 0.0
    %727 = vmatprep.subr.mxu0 0.0
    %728 = vmatpush1.xpose.msra.mxu0 0.0
    %729 = vmatprep.subr.mxu0 0.0
    %730 = vmatpush1.xpose.msra.mxu0 0.0
    %731 = vmatprep.subr.mxu0 0.0
    %732 = vmatpush1.xpose.msra.mxu0 0.0
    %733 = vmatprep.subr.mxu0 0.0
    %734 = vmatpush1.xpose.msra.mxu0 0.0
    %735 = vmatprep.subr.mxu0 0.0
    %736 = vmatpush1.xpose.msra.mxu0 0.0
    %737 = vmatprep.subr.mxu0 0.0
    %738 = vmatpush1.xpose.msra.mxu0 0.0
    %739 = vmatprep.subr.mxu0 0.0
    %740 = vmatpush1.xpose.msra.mxu0 0.0
    %741 = vmatprep.subr.mxu0 0.0
    %742 = vmatpush1.xpose.msra.mxu0 0.0
    %743 = vmatprep.subr.mxu0 0.0
    %744 = vmatpush1.xpose.msra.mxu0 0.0
    %745 = vmatprep.subr.mxu0 0.0
    %746 = vmatpush1.xpose.msra.mxu0 0.0
    %747 = vmatprep.subr.mxu0 0.0
    %748 = vmatpush1.xpose.msra.mxu0 0.0
    %749 = vmatprep.subr.mxu0 0.0
    %750 = vmatpush1.xpose.msra.mxu0 0.0
    %751 = vmatprep.subr.mxu0 0.0
    %752 = vmatpush1.xpose.msra.mxu0 0.0
    %753 = vmatprep.subr.mxu0 0.0
    %754 = vmatpush1.xpose.msra.mxu0 0.0
    %755 = vmatprep.mubr.f32.mxu0 0.0
    %v756 = vand.u32 %v686, 4294901760
    %v757 = vsub.f32 %v686, %v756
    %v758 = vand.u32 %v757, 4294901760
    %v759 = vsub.f32 %v757, %v758
    %v760 = vand.u32 %v759, 4294901760
    %761 = vmatmul.mubr.f32.gmra.mrb[0].mxu0 %v760
    %v762 = vpop.f32.mrb[0].mxu0
    %v763 = vadd.f32 0.0, %v762
    %v764 = vpop.f32.mrb[0].mxu0
    %765 = vdwg.mxu0
    %766 = vmatprep.subr.mxu0 0.0
    %v767 = vand.u32 %v688, 4294901760
    %v768 = vsub.f32 %v688, %v767
    %v769 = vand.u32 %v768, 4294901760
    %v770 = vsub.f32 %v768, %v769
    %v771 = vand.u32 %v770, 4294901760
    %772 = vmatpush1.xpose.msra.mxu0 %v771
    %773 = vmatprep.subr.mxu0 0.0
    %774 = vmatpush1.xpose.msra.mxu0 0.0
    %775 = vmatprep.subr.mxu0 0.0
    %776 = vmatpush1.xpose.msra.mxu0 0.0
    %777 = vmatprep.subr.mxu0 0.0
    %778 = vmatpush1.xpose.msra.mxu0 0.0
    %779 = vmatprep.subr.mxu0 0.0
    %780 = vmatpush1.xpose.msra.mxu0 0.0
    %781 = vmatprep.subr.mxu0 0.0
    %782 = vmatpush1.xpose.msra.mxu0 0.0
    %783 = vmatprep.subr.mxu0 0.0
    %784 = vmatpush1.xpose.msra.mxu0 0.0
    %785 = vmatprep.subr.mxu0 0.0
    %786 = vmatpush1.xpose.msra.mxu0 0.0
    %787 = vmatprep.subr.mxu0 0.0
    %788 = vmatpush1.xpose.msra.mxu0 0.0
    %789 = vmatprep.subr.mxu0 0.0
    %790 = vmatpush1.xpose.msra.mxu0 0.0
    %791 = vmatprep.subr.mxu0 0.0
    %792 = vmatpush1.xpose.msra.mxu0 0.0
    %793 = vmatprep.subr.mxu0 0.0
    %794 = vmatpush1.xpose.msra.mxu0 0.0
    %795 = vmatprep.subr.mxu0 0.0
    %796 = vmatpush1.xpose.msra.mxu0 0.0
    %797 = vmatprep.subr.mxu0 0.0
    %798 = vmatpush1.xpose.msra.mxu0 0.0
    %799 = vmatprep.subr.mxu0 0.0
    %800 = vmatpush1.xpose.msra.mxu0 0.0
    %801 = vmatprep.subr.mxu0 0.0
    %802 = vmatpush1.xpose.msra.mxu0 0.0
    %803 = vmatprep.subr.mxu0 0.0
    %804 = vmatpush1.xpose.msra.mxu0 0.0
    %805 = vmatprep.subr.mxu0 0.0
    %806 = vmatpush1.xpose.msra.mxu0 0.0
    %807 = vmatprep.subr.mxu0 0.0
    %808 = vmatpush1.xpose.msra.mxu0 0.0
    %809 = vmatprep.subr.mxu0 0.0
    %810 = vmatpush1.xpose.msra.mxu0 0.0
    %811 = vmatprep.subr.mxu0 0.0
    %812 = vmatpush1.xpose.msra.mxu0 0.0
    %813 = vmatprep.subr.mxu0 0.0
    %814 = vmatpush1.xpose.msra.mxu0 0.0
    %815 = vmatprep.subr.mxu0 0.0
    %816 = vmatpush1.xpose.msra.mxu0 0.0
    %817 = vmatprep.subr.mxu0 0.0
    %818 = vmatpush1.xpose.msra.mxu0 0.0
    %819 = vmatprep.subr.mxu0 0.0
    %820 = vmatpush1.xpose.msra.mxu0 0.0
    %821 = vmatprep.subr.mxu0 0.0
    %822 = vmatpush1.xpose.msra.mxu0 0.0
    %823 = vmatprep.subr.mxu0 0.0
    %824 = vmatpush1.xpose.msra.mxu0 0.0
    %825 = vmatprep.subr.mxu0 0.0
    %826 = vmatpush1.xpose.msra.mxu0 0.0
    %827 = vmatprep.subr.mxu0 0.0
    %828 = vmatpush1.xpose.msra.mxu0 0.0
    %829 = vmatprep.subr.mxu0 0.0
    %830 = vmatpush1.xpose.msra.mxu0 0.0
    %831 = vmatprep.subr.mxu0 0.0
    %832 = vmatpush1.xpose.msra.mxu0 0.0
    %833 = vmatprep.subr.mxu0 0.0
    %834 = vmatpush1.xpose.msra.mxu0 0.0
    %835 = vmatprep.mubr.f32.mxu0 0.0
    %v836 = vand.u32 %v686, 4294901760
    %837 = vmatmul.mubr.f32.gmra.mrb[0].mxu0 %v836
    %v838 = vpop.f32.mrb[0].mxu0
    %v839 = vadd.f32 %v763, %v838
    %v840 = vpop.f32.mrb[0].mxu0
    %841 = vdwg.mxu0
    %842 = vmatprep.subr.mxu0 0.0
    %v843 = vand.u32 %v688, 4294901760
    %v844 = vsub.f32 %v688, %v843
    %845 = vmatpush1.xpose.msra.mxu0 %v844
    %846 = vmatprep.subr.mxu0 0.0
    %847 = vmatpush1.xpose.msra.mxu0 0.0
    %848 = vmatprep.subr.mxu0 0.0
    %849 = vmatpush1.xpose.msra.mxu0 0.0
    %850 = vmatprep.subr.mxu0 0.0
    %851 = vmatpush1.xpose.msra.mxu0 0.0
    %852 = vmatprep.subr.mxu0 0.0
    %853 = vmatpush1.xpose.msra.mxu0 0.0
    %854 = vmatprep.subr.mxu0 0.0
    %855 = vmatpush1.xpose.msra.mxu0 0.0
    %856 = vmatprep.subr.mxu0 0.0
    %857 = vmatpush1.xpose.msra.mxu0 0.0
    %858 = vmatprep.subr.mxu0 0.0
    %859 = vmatpush1.xpose.msra.mxu0 0.0
    %860 = vmatprep.subr.mxu0 0.0
    %861 = vmatpush1.xpose.msra.mxu0 0.0
    %862 = vmatprep.subr.mxu0 0.0
    %863 = vmatpush1.xpose.msra.mxu0 0.0
    %864 = vmatprep.subr.mxu0 0.0
    %865 = vmatpush1.xpose.msra.mxu0 0.0
    %866 = vmatprep.subr.mxu0 0.0
    %867 = vmatpush1.xpose.msra.mxu0 0.0
    %868 = vmatprep.subr.mxu0 0.0
    %869 = vmatpush1.xpose.msra.mxu0 0.0
    %870 = vmatprep.subr.mxu0 0.0
    %871 = vmatpush1.xpose.msra.mxu0 0.0
    %872 = vmatprep.subr.mxu0 0.0
    %873 = vmatpush1.xpose.msra.mxu0 0.0
    %874 = vmatprep.subr.mxu0 0.0
    %875 = vmatpush1.xpose.msra.mxu0 0.0
    %876 = vmatprep.subr.mxu0 0.0
    %877 = vmatpush1.xpose.msra.mxu0 0.0
    %878 = vmatprep.subr.mxu0 0.0
    %879 = vmatpush1.xpose.msra.mxu0 0.0
    %880 = vmatprep.subr.mxu0 0.0
    %881 = vmatpush1.xpose.msra.mxu0 0.0
    %882 = vmatprep.subr.mxu0 0.0
    %883 = vmatpush1.xpose.msra.mxu0 0.0
    %884 = vmatprep.subr.mxu0 0.0
    %885 = vmatpush1.xpose.msra.mxu0 0.0
    %886 = vmatprep.subr.mxu0 0.0
    %887 = vmatpush1.xpose.msra.mxu0 0.0
    %888 = vmatprep.subr.mxu0 0.0
    %889 = vmatpush1.xpose.msra.mxu0 0.0
    %890 = vmatprep.subr.mxu0 0.0
    %891 = vmatpush1.xpose.msra.mxu0 0.0
    %892 = vmatprep.subr.mxu0 0.0
    %893 = vmatpush1.xpose.msra.mxu0 0.0
    %894 = vmatprep.subr.mxu0 0.0
    %895 = vmatpush1.xpose.msra.mxu0 0.0
    %896 = vmatprep.subr.mxu0 0.0
    %897 = vmatpush1.xpose.msra.mxu0 0.0
    %898 = vmatprep.subr.mxu0 0.0
    %899 = vmatpush1.xpose.msra.mxu0 0.0
    %900 = vmatprep.subr.mxu0 0.0
    %901 = vmatpush1.xpose.msra.mxu0 0.0
    %902 = vmatprep.subr.mxu0 0.0
    %903 = vmatpush1.xpose.msra.mxu0 0.0
    %904 = vmatprep.subr.mxu0 0.0
    %905 = vmatpush1.xpose.msra.mxu0 0.0
    %906 = vmatprep.subr.mxu0 0.0
    %907 = vmatpush1.xpose.msra.mxu0 0.0
    %908 = vmatprep.mubr.f32.mxu0 0.0
    %v909 = vand.u32 %v686, 4294901760
    %v910 = vsub.f32 %v686, %v909
    %911 = vmatmul.mubr.f32.gmra.mrb[0].mxu0 %v910
    %v912 = vpop.f32.mrb[0].mxu0
    %v913 = vadd.f32 %v839, %v912
    %v914 = vpop.f32.mrb[0].mxu0
    %915 = vdwg.mxu0
    %916 = vmatprep.subr.mxu0 0.0
    %v917 = vand.u32 %v688, 4294901760
    %918 = vmatpush1.xpose.msra.mxu0 %v917
    %919 = vmatprep.subr.mxu0 0.0
    %920 = vmatpush1.xpose.msra.mxu0 0.0
    %921 = vmatprep.subr.mxu0 0.0
    %922 = vmatpush1.xpose.msra.mxu0 0.0
    %923 = vmatprep.subr.mxu0 0.0
    %924 = vmatpush1.xpose.msra.mxu0 0.0
    %925 = vmatprep.subr.mxu0 0.0
    %926 = vmatpush1.xpose.msra.mxu0 0.0
    %927 = vmatprep.subr.mxu0 0.0
    %928 = vmatpush1.xpose.msra.mxu0 0.0
    %929 = vmatprep.subr.mxu0 0.0
    %930 = vmatpush1.xpose.msra.mxu0 0.0
    %931 = vmatprep.subr.mxu0 0.0
    %932 = vmatpush1.xpose.msra.mxu0 0.0
    %933 = vmatprep.subr.mxu0 0.0
    %934 = vmatpush1.xpose.msra.mxu0 0.0
    %935 = vmatprep.subr.mxu0 0.0
    %936 = vmatpush1.xpose.msra.mxu0 0.0
    %937 = vmatprep.subr.mxu0 0.0
    %938 = vmatpush1.xpose.msra.mxu0 0.0
    %939 = vmatprep.subr.mxu0 0.0
    %940 = vmatpush1.xpose.msra.mxu0 0.0
    %941 = vmatprep.subr.mxu0 0.0
    %942 = vmatpush1.xpose.msra.mxu0 0.0
    %943 = vmatprep.subr.mxu0 0.0
    %944 = vmatpush1.xpose.msra.mxu0 0.0
    %945 = vmatprep.subr.mxu0 0.0
    %946 = vmatpush1.xpose.msra.mxu0 0.0
    %947 = vmatprep.subr.mxu0 0.0
    %948 = vmatpush1.xpose.msra.mxu0 0.0
    %949 = vmatprep.subr.mxu0 0.0
    %950 = vmatpush1.xpose.msra.mxu0 0.0
    %951 = vmatprep.subr.mxu0 0.0
    %952 = vmatpush1.xpose.msra.mxu0 0.0
    %953 = vmatprep.subr.mxu0 0.0
    %954 = vmatpush1.xpose.msra.mxu0 0.0
    %955 = vmatprep.subr.mxu0 0.0
    %956 = vmatpush1.xpose.msra.mxu0 0.0
    %957 = vmatprep.subr.mxu0 0.0
    %958 = vmatpush1.xpose.msra.mxu0 0.0
    %959 = vmatprep.subr.mxu0 0.0
    %960 = vmatpush1.xpose.msra.mxu0 0.0
    %961 = vmatprep.subr.mxu0 0.0
    %962 = vmatpush1.xpose.msra.mxu0 0.0
    %963 = vmatprep.subr.mxu0 0.0
    %964 = vmatpush1.xpose.msra.mxu0 0.0
    %965 = vmatprep.subr.mxu0 0.0
    %966 = vmatpush1.xpose.msra.mxu0 0.0
    %967 = vmatprep.subr.mxu0 0.0
    %968 = vmatpush1.xpose.msra.mxu0 0.0
    %969 = vmatprep.subr.mxu0 0.0
    %970 = vmatpush1.xpose.msra.mxu0 0.0
    %971 = vmatprep.subr.mxu0 0.0
    %972 = vmatpush1.xpose.msra.mxu0 0.0
    %973 = vmatprep.subr.mxu0 0.0
    %974 = vmatpush1.xpose.msra.mxu0 0.0
    %975 = vmatprep.subr.mxu0 0.0
    %976 = vmatpush1.xpose.msra.mxu0 0.0
    %977 = vmatprep.subr.mxu0 0.0
    %978 = vmatpush1.xpose.msra.mxu0 0.0
    %979 = vmatprep.subr.mxu0 0.0
    %980 = vmatpush1.xpose.msra.mxu0 0.0
    %981 = vmatprep.mubr.f32.mxu0 0.0
    %v982 = vand.u32 %v686, 4294901760
    %v983 = vsub.f32 %v686, %v982
    %v984 = vand.u32 %v983, 4294901760
    %985 = vmatmul.mubr.f32.gmra.mrb[0].mxu0 %v984
    %v986 = vpop.f32.mrb[0].mxu0
    %v987 = vadd.f32 %v913, %v986
    %v988 = vpop.f32.mrb[0].mxu0
    %989 = vdwg.mxu0
    %990 = vmatprep.subr.mxu0 0.0
    %v991 = vand.u32 %v688, 4294901760
    %v992 = vsub.f32 %v688, %v991
    %v993 = vand.u32 %v992, 4294901760
    %994 = vmatpush1.xpose.msra.mxu0 %v993
    %995 = vmatprep.subr.mxu0 0.0
    %996 = vmatpush1.xpose.msra.mxu0 0.0
    %997 = vmatprep.subr.mxu0 0.0
    %998 = vmatpush1.xpose.msra.mxu0 0.0
    %999 = vmatprep.subr.mxu0 0.0
    %1000 = vmatpush1.xpose.msra.mxu0 0.0
    %1001 = vmatprep.subr.mxu0 0.0
    %1002 = vmatpush1.xpose.msra.mxu0 0.0
    %1003 = vmatprep.subr.mxu0 0.0
    %1004 = vmatpush1.xpose.msra.mxu0 0.0
    %1005 = vmatprep.subr.mxu0 0.0
    %1006 = vmatpush1.xpose.msra.mxu0 0.0
    %1007 = vmatprep.subr.mxu0 0.0
    %1008 = vmatpush1.xpose.msra.mxu0 0.0
    %1009 = vmatprep.subr.mxu0 0.0
    %1010 = vmatpush1.xpose.msra.mxu0 0.0
    %1011 = vmatprep.subr.mxu0 0.0
    %1012 = vmatpush1.xpose.msra.mxu0 0.0
    %1013 = vmatprep.subr.mxu0 0.0
    %1014 = vmatpush1.xpose.msra.mxu0 0.0
    %1015 = vmatprep.subr.mxu0 0.0
    %1016 = vmatpush1.xpose.msra.mxu0 0.0
    %1017 = vmatprep.subr.mxu0 0.0
    %1018 = vmatpush1.xpose.msra.mxu0 0.0
    %1019 = vmatprep.subr.mxu0 0.0
    %1020 = vmatpush1.xpose.msra.mxu0 0.0
    %1021 = vmatprep.subr.mxu0 0.0
    %1022 = vmatpush1.xpose.msra.mxu0 0.0
    %1023 = vmatprep.subr.mxu0 0.0
    %1024 = vmatpush1.xpose.msra.mxu0 0.0
    %1025 = vmatprep.subr.mxu0 0.0
    %1026 = vmatpush1.xpose.msra.mxu0 0.0
    %1027 = vmatprep.subr.mxu0 0.0
    %1028 = vmatpush1.xpose.msra.mxu0 0.0
    %1029 = vmatprep.subr.mxu0 0.0
    %1030 = vmatpush1.xpose.msra.mxu0 0.0
    %1031 = vmatprep.subr.mxu0 0.0
    %1032 = vmatpush1.xpose.msra.mxu0 0.0
    %1033 = vmatprep.subr.mxu0 0.0
    %1034 = vmatpush1.xpose.msra.mxu0 0.0
    %1035 = vmatprep.subr.mxu0 0.0
    %1036 = vmatpush1.xpose.msra.mxu0 0.0
    %1037 = vmatprep.subr.mxu0 0.0
    %1038 = vmatpush1.xpose.msra.mxu0 0.0
    %1039 = vmatprep.subr.mxu0 0.0
    %1040 = vmatpush1.xpose.msra.mxu0 0.0
    %1041 = vmatprep.subr.mxu0 0.0
    %1042 = vmatpush1.xpose.msra.mxu0 0.0
    %1043 = vmatprep.subr.mxu0 0.0
    %1044 = vmatpush1.xpose.msra.mxu0 0.0
    %1045 = vmatprep.subr.mxu0 0.0
    %1046 = vmatpush1.xpose.msra.mxu0 0.0
    %1047 = vmatprep.subr.mxu0 0.0
    %1048 = vmatpush1.xpose.msra.mxu0 0.0
    %1049 = vmatprep.subr.mxu0 0.0
    %1050 = vmatpush1.xpose.msra.mxu0 0.0
    %1051 = vmatprep.subr.mxu0 0.0
    %1052 = vmatpush1.xpose.msra.mxu0 0.0
    %1053 = vmatprep.subr.mxu0 0.0
    %1054 = vmatpush1.xpose.msra.mxu0 0.0
    %1055 = vmatprep.subr.mxu0 0.0
    %1056 = vmatpush1.xpose.msra.mxu0 0.0
    %1057 = vmatprep.mubr.f32.mxu0 0.0
    %v1058 = vand.u32 %v686, 4294901760
    %1059 = vmatmul.mubr.f32.gmra.mrb[0].mxu0 %v1058
    %v1060 = vpop.f32.mrb[0].mxu0
    %v1061 = vadd.f32 %v987, %v1060
    %v1062 = vpop.f32.mrb[0].mxu0
    %1063 = vdwg.mxu0
    %1064 = vmatprep.subr.mxu0 0.0
    %v1065 = vand.u32 %v688, 4294901760
    %1066 = vmatpush1.xpose.msra.mxu0 %v1065
    %1067 = vmatprep.subr.mxu0 0.0
    %1068 = vmatpush1.xpose.msra.mxu0 0.0
    %1069 = vmatprep.subr.mxu0 0.0
    %1070 = vmatpush1.xpose.msra.mxu0 0.0
    %1071 = vmatprep.subr.mxu0 0.0
    %1072 = vmatpush1.xpose.msra.mxu0 0.0
    %1073 = vmatprep.subr.mxu0 0.0
    %1074 = vmatpush1.xpose.msra.mxu0 0.0
    %1075 = vmatprep.subr.mxu0 0.0
    %1076 = vmatpush1.xpose.msra.mxu0 0.0
    %1077 = vmatprep.subr.mxu0 0.0
    %1078 = vmatpush1.xpose.msra.mxu0 0.0
    %1079 = vmatprep.subr.mxu0 0.0
    %1080 = vmatpush1.xpose.msra.mxu0 0.0
    %1081 = vmatprep.subr.mxu0 0.0
    %1082 = vmatpush1.xpose.msra.mxu0 0.0
    %1083 = vmatprep.subr.mxu0 0.0
    %1084 = vmatpush1.xpose.msra.mxu0 0.0
    %1085 = vmatprep.subr.mxu0 0.0
    %1086 = vmatpush1.xpose.msra.mxu0 0.0
    %1087 = vmatprep.subr.mxu0 0.0
    %1088 = vmatpush1.xpose.msra.mxu0 0.0
    %1089 = vmatprep.subr.mxu0 0.0
    %1090 = vmatpush1.xpose.msra.mxu0 0.0
    %1091 = vmatprep.subr.mxu0 0.0
    %1092 = vmatpush1.xpose.msra.mxu0 0.0
    %1093 = vmatprep.subr.mxu0 0.0
    %1094 = vmatpush1.xpose.msra.mxu0 0.0
    %1095 = vmatprep.subr.mxu0 0.0
    %1096 = vmatpush1.xpose.msra.mxu0 0.0
    %1097 = vmatprep.subr.mxu0 0.0
    %1098 = vmatpush1.xpose.msra.mxu0 0.0
    %1099 = vmatprep.subr.mxu0 0.0
    %1100 = vmatpush1.xpose.msra.mxu0 0.0
    %1101 = vmatprep.subr.mxu0 0.0
    %1102 = vmatpush1.xpose.msra.mxu0 0.0
    %1103 = vmatprep.subr.mxu0 0.0
    %1104 = vmatpush1.xpose.msra.mxu0 0.0
    %1105 = vmatprep.subr.mxu0 0.0
    %1106 = vmatpush1.xpose.msra.mxu0 0.0
    %1107 = vmatprep.subr.mxu0 0.0
    %1108 = vmatpush1.xpose.msra.mxu0 0.0
    %1109 = vmatprep.subr.mxu0 0.0
    %1110 = vmatpush1.xpose.msra.mxu0 0.0
    %1111 = vmatprep.subr.mxu0 0.0
    %1112 = vmatpush1.xpose.msra.mxu0 0.0
    %1113 = vmatprep.subr.mxu0 0.0
    %1114 = vmatpush1.xpose.msra.mxu0 0.0
    %1115 = vmatprep.subr.mxu0 0.0
    %1116 = vmatpush1.xpose.msra.mxu0 0.0
    %1117 = vmatprep.subr.mxu0 0.0
    %1118 = vmatpush1.xpose.msra.mxu0 0.0
    %1119 = vmatprep.subr.mxu0 0.0
    %1120 = vmatpush1.xpose.msra.mxu0 0.0
    %1121 = vmatprep.subr.mxu0 0.0
    %1122 = vmatpush1.xpose.msra.mxu0 0.0
    %1123 = vmatprep.subr.mxu0 0.0
    %1124 = vmatpush1.xpose.msra.mxu0 0.0
    %1125 = vmatprep.subr.mxu0 0.0
    %1126 = vmatpush1.xpose.msra.mxu0 0.0
    %1127 = vmatprep.subr.mxu0 0.0
    %1128 = vmatpush1.xpose.msra.mxu0 0.0
    %1129 = vmatprep.mubr.f32.mxu0 0.0
    %v1130 = vand.u32 %v686, 4294901760
    %1131 = vmatmul.mubr.f32.gmra.mrb[0].mxu0 %v1130
    %v1132 = vpop.f32.mrb[0].mxu0
    %v1133 = vadd.f32 %v1061, %v1132
    %v1134 = vpop.f32.mrb[0].mxu0
    %1135 = vdwg.mxu0
    %1137 = vrot.lane.b32.xlu0 %v681, 96
    %v1138 = vpop.permute.xlu0 %1137
    %v1140 = vsel %vm35, %v670, 0
    %v1142 = vsel %vm35, %v1138, 0
    %1144 = vmatprep.subr.mxu0 0.0
    %v1145 = vand.u32 %v1142, 4294901760
    %1146 = vmatpush1.xpose.msra.mxu0 %v1145
    %1147 = vmatprep.subr.mxu0 0.0
    %1148 = vmatpush1.xpose.msra.mxu0 0.0
    %1149 = vmatprep.subr.mxu0 0.0
    %1150 = vmatpush1.xpose.msra.mxu0 0.0
    %1151 = vmatprep.subr.mxu0 0.0
    %1152 = vmatpush1.xpose.msra.mxu0 0.0
    %1153 = vmatprep.subr.mxu0 0.0
    %1154 = vmatpush1.xpose.msra.mxu0 0.0
    %1155 = vmatprep.subr.mxu0 0.0
    %1156 = vmatpush1.xpose.msra.mxu0 0.0
    %1157 = vmatprep.subr.mxu0 0.0
    %1158 = vmatpush1.xpose.msra.mxu0 0.0
    %1159 = vmatprep.subr.mxu0 0.0
    %1160 = vmatpush1.xpose.msra.mxu0 0.0
    %1161 = vmatprep.subr.mxu0 0.0
    %1162 = vmatpush1.xpose.msra.mxu0 0.0
    %1163 = vmatprep.subr.mxu0 0.0
    %1164 = vmatpush1.xpose.msra.mxu0 0.0
    %1165 = vmatprep.subr.mxu0 0.0
    %1166 = vmatpush1.xpose.msra.mxu0 0.0
    %1167 = vmatprep.subr.mxu0 0.0
    %1168 = vmatpush1.xpose.msra.mxu0 0.0
    %1169 = vmatprep.subr.mxu0 0.0
    %1170 = vmatpush1.xpose.msra.mxu0 0.0
    %1171 = vmatprep.subr.mxu0 0.0
    %1172 = vmatpush1.xpose.msra.mxu0 0.0
    %1173 = vmatprep.subr.mxu0 0.0
    %1174 = vmatpush1.xpose.msra.mxu0 0.0
    %1175 = vmatprep.subr.mxu0 0.0
    %1176 = vmatpush1.xpose.msra.mxu0 0.0
    %1177 = vmatprep.subr.mxu0 0.0
    %1178 = vmatpush1.xpose.msra.mxu0 0.0
    %1179 = vmatprep.subr.mxu0 0.0
    %1180 = vmatpush1.xpose.msra.mxu0 0.0
    %1181 = vmatprep.subr.mxu0 0.0
    %1182 = vmatpush1.xpose.msra.mxu0 0.0
    %1183 = vmatprep.subr.mxu0 0.0
    %1184 = vmatpush1.xpose.msra.mxu0 0.0
    %1185 = vmatprep.subr.mxu0 0.0
    %1186 = vmatpush1.xpose.msra.mxu0 0.0
    %1187 = vmatprep.subr.mxu0 0.0
    %1188 = vmatpush1.xpose.msra.mxu0 0.0
    %1189 = vmatprep.subr.mxu0 0.0
    %1190 = vmatpush1.xpose.msra.mxu0 0.0
    %1191 = vmatprep.subr.mxu0 0.0
    %1192 = vmatpush1.xpose.msra.mxu0 0.0
    %1193 = vmatprep.subr.mxu0 0.0
    %1194 = vmatpush1.xpose.msra.mxu0 0.0
    %1195 = vmatprep.subr.mxu0 0.0
    %1196 = vmatpush1.xpose.msra.mxu0 0.0
    %1197 = vmatprep.subr.mxu0 0.0
    %1198 = vmatpush1.xpose.msra.mxu0 0.0
    %1199 = vmatprep.subr.mxu0 0.0
    %1200 = vmatpush1.xpose.msra.mxu0 0.0
    %1201 = vmatprep.subr.mxu0 0.0
    %1202 = vmatpush1.xpose.msra.mxu0 0.0
    %1203 = vmatprep.subr.mxu0 0.0
    %1204 = vmatpush1.xpose.msra.mxu0 0.0
    %1205 = vmatprep.subr.mxu0 0.0
    %1206 = vmatpush1.xpose.msra.mxu0 0.0
    %1207 = vmatprep.subr.mxu0 0.0
    %1208 = vmatpush1.xpose.msra.mxu0 0.0
    %1209 = vmatprep.mubr.f32.mxu0 0.0
    %v1210 = vand.u32 %v1140, 4294901760
    %v1211 = vsub.f32 %v1140, %v1210
    %v1212 = vand.u32 %v1211, 4294901760
    %v1213 = vsub.f32 %v1211, %v1212
    %v1214 = vand.u32 %v1213, 4294901760
    %1215 = vmatmul.mubr.f32.gmra.mrb[0].mxu0 %v1214
    %v1216 = vpop.f32.mrb[0].mxu0
    %v1217 = vadd.f32 0.0, %v1216
    %v1218 = vpop.f32.mrb[0].mxu0
    %1219 = vdwg.mxu0
    %1220 = vmatprep.subr.mxu0 0.0
    %v1221 = vand.u32 %v1142, 4294901760
    %v1222 = vsub.f32 %v1142, %v1221
    %v1223 = vand.u32 %v1222, 4294901760
    %v1224 = vsub.f32 %v1222, %v1223
    %v1225 = vand.u32 %v1224, 4294901760
    %1226 = vmatpush1.xpose.msra.mxu0 %v1225
    %1227 = vmatprep.subr.mxu0 0.0
    %1228 = vmatpush1.xpose.msra.mxu0 0.0
    %1229 = vmatprep.subr.mxu0 0.0
    %1230 = vmatpush1.xpose.msra.mxu0 0.0
    %1231 = vmatprep.subr.mxu0 0.0
    %1232 = vmatpush1.xpose.msra.mxu0 0.0
    %1233 = vmatprep.subr.mxu0 0.0
    %1234 = vmatpush1.xpose.msra.mxu0 0.0
    %1235 = vmatprep.subr.mxu0 0.0
    %1236 = vmatpush1.xpose.msra.mxu0 0.0
    %1237 = vmatprep.subr.mxu0 0.0
    %1238 = vmatpush1.xpose.msra.mxu0 0.0
    %1239 = vmatprep.subr.mxu0 0.0
    %1240 = vmatpush1.xpose.msra.mxu0 0.0
    %1241 = vmatprep.subr.mxu0 0.0
    %1242 = vmatpush1.xpose.msra.mxu0 0.0
    %1243 = vmatprep.subr.mxu0 0.0
    %1244 = vmatpush1.xpose.msra.mxu0 0.0
    %1245 = vmatprep.subr.mxu0 0.0
    %1246 = vmatpush1.xpose.msra.mxu0 0.0
    %1247 = vmatprep.subr.mxu0 0.0
    %1248 = vmatpush1.xpose.msra.mxu0 0.0
    %1249 = vmatprep.subr.mxu0 0.0
    %1250 = vmatpush1.xpose.msra.mxu0 0.0
    %1251 = vmatprep.subr.mxu0 0.0
    %1252 = vmatpush1.xpose.msra.mxu0 0.0
    %1253 = vmatprep.subr.mxu0 0.0
    %1254 = vmatpush1.xpose.msra.mxu0 0.0
    %1255 = vmatprep.subr.mxu0 0.0
    %1256 = vmatpush1.xpose.msra.mxu0 0.0
    %1257 = vmatprep.subr.mxu0 0.0
    %1258 = vmatpush1.xpose.msra.mxu0 0.0
    %1259 = vmatprep.subr.mxu0 0.0
    %1260 = vmatpush1.xpose.msra.mxu0 0.0
    %1261 = vmatprep.subr.mxu0 0.0
    %1262 = vmatpush1.xpose.msra.mxu0 0.0
    %1263 = vmatprep.subr.mxu0 0.0
    %1264 = vmatpush1.xpose.msra.mxu0 0.0
    %1265 = vmatprep.subr.mxu0 0.0
    %1266 = vmatpush1.xpose.msra.mxu0 0.0
    %1267 = vmatprep.subr.mxu0 0.0
    %1268 = vmatpush1.xpose.msra.mxu0 0.0
    %1269 = vmatprep.subr.mxu0 0.0
    %1270 = vmatpush1.xpose.msra.mxu0 0.0
    %1271 = vmatprep.subr.mxu0 0.0
    %1272 = vmatpush1.xpose.msra.mxu0 0.0
    %1273 = vmatprep.subr.mxu0 0.0
    %1274 = vmatpush1.xpose.msra.mxu0 0.0
    %1275 = vmatprep.subr.mxu0 0.0
    %1276 = vmatpush1.xpose.msra.mxu0 0.0
    %1277 = vmatprep.subr.mxu0 0.0
    %1278 = vmatpush1.xpose.msra.mxu0 0.0
    %1279 = vmatprep.subr.mxu0 0.0
    %1280 = vmatpush1.xpose.msra.mxu0 0.0
    %1281 = vmatprep.subr.mxu0 0.0
    %1282 = vmatpush1.xpose.msra.mxu0 0.0
    %1283 = vmatprep.subr.mxu0 0.0
    %1284 = vmatpush1.xpose.msra.mxu0 0.0
    %1285 = vmatprep.subr.mxu0 0.0
    %1286 = vmatpush1.xpose.msra.mxu0 0.0
    %1287 = vmatprep.subr.mxu0 0.0
    %1288 = vmatpush1.xpose.msra.mxu0 0.0
    %1289 = vmatprep.mubr.f32.mxu0 0.0
    %v1290 = vand.u32 %v1140, 4294901760
    %1291 = vmatmul.mubr.f32.gmra.mrb[0].mxu0 %v1290
    %v1292 = vpop.f32.mrb[0].mxu0
    %v1293 = vadd.f32 %v1217, %v1292
    %v1294 = vpop.f32.mrb[0].mxu0
    %1295 = vdwg.mxu0
    %1296 = vmatprep.subr.mxu0 0.0
    %v1297 = vand.u32 %v1142, 4294901760
    %v1298 = vsub.f32 %v1142, %v1297
    %1299 = vmatpush1.xpose.msra.mxu0 %v1298
    %1300 = vmatprep.subr.mxu0 0.0
    %1301 = vmatpush1.xpose.msra.mxu0 0.0
    %1302 = vmatprep.subr.mxu0 0.0
    %1303 = vmatpush1.xpose.msra.mxu0 0.0
    %1304 = vmatprep.subr.mxu0 0.0
    %1305 = vmatpush1.xpose.msra.mxu0 0.0
    %1306 = vmatprep.subr.mxu0 0.0
    %1307 = vmatpush1.xpose.msra.mxu0 0.0
    %1308 = vmatprep.subr.mxu0 0.0
    %1309 = vmatpush1.xpose.msra.mxu0 0.0
    %1310 = vmatprep.subr.mxu0 0.0
    %1311 = vmatpush1.xpose.msra.mxu0 0.0
    %1312 = vmatprep.subr.mxu0 0.0
    %1313 = vmatpush1.xpose.msra.mxu0 0.0
    %1314 = vmatprep.subr.mxu0 0.0
    %1315 = vmatpush1.xpose.msra.mxu0 0.0
    %1316 = vmatprep.subr.mxu0 0.0
    %1317 = vmatpush1.xpose.msra.mxu0 0.0
    %1318 = vmatprep.subr.mxu0 0.0
    %1319 = vmatpush1.xpose.msra.mxu0 0.0
    %1320 = vmatprep.subr.mxu0 0.0
    %1321 = vmatpush1.xpose.msra.mxu0 0.0
    %1322 = vmatprep.subr.mxu0 0.0
    %1323 = vmatpush1.xpose.msra.mxu0 0.0
    %1324 = vmatprep.subr.mxu0 0.0
    %1325 = vmatpush1.xpose.msra.mxu0 0.0
    %1326 = vmatprep.subr.mxu0 0.0
    %1327 = vmatpush1.xpose.msra.mxu0 0.0
    %1328 = vmatprep.subr.mxu0 0.0
    %1329 = vmatpush1.xpose.msra.mxu0 0.0
    %1330 = vmatprep.subr.mxu0 0.0
    %1331 = vmatpush1.xpose.msra.mxu0 0.0
    %1332 = vmatprep.subr.mxu0 0.0
    %1333 = vmatpush1.xpose.msra.mxu0 0.0
    %1334 = vmatprep.subr.mxu0 0.0
    %1335 = vmatpush1.xpose.msra.mxu0 0.0
    %1336 = vmatprep.subr.mxu0 0.0
    %1337 = vmatpush1.xpose.msra.mxu0 0.0
    %1338 = vmatprep.subr.mxu0 0.0
    %1339 = vmatpush1.xpose.msra.mxu0 0.0
    %1340 = vmatprep.subr.mxu0 0.0
    %1341 = vmatpush1.xpose.msra.mxu0 0.0
    %1342 = vmatprep.subr.mxu0 0.0
    %1343 = vmatpush1.xpose.msra.mxu0 0.0
    %1344 = vmatprep.subr.mxu0 0.0
    %1345 = vmatpush1.xpose.msra.mxu0 0.0
    %1346 = vmatprep.subr.mxu0 0.0
    %1347 = vmatpush1.xpose.msra.mxu0 0.0
    %1348 = vmatprep.subr.mxu0 0.0
    %1349 = vmatpush1.xpose.msra.mxu0 0.0
    %1350 = vmatprep.subr.mxu0 0.0
    %1351 = vmatpush1.xpose.msra.mxu0 0.0
    %1352 = vmatprep.subr.mxu0 0.0
    %1353 = vmatpush1.xpose.msra.mxu0 0.0
    %1354 = vmatprep.subr.mxu0 0.0
    %1355 = vmatpush1.xpose.msra.mxu0 0.0
    %1356 = vmatprep.subr.mxu0 0.0
    %1357 = vmatpush1.xpose.msra.mxu0 0.0
    %1358 = vmatprep.subr.mxu0 0.0
    %1359 = vmatpush1.xpose.msra.mxu0 0.0
    %1360 = vmatprep.subr.mxu0 0.0
    %1361 = vmatpush1.xpose.msra.mxu0 0.0
    %1362 = vmatprep.mubr.f32.mxu0 0.0
    %v1363 = vand.u32 %v1140, 4294901760
    %v1364 = vsub.f32 %v1140, %v1363
    %1365 = vmatmul.mubr.f32.gmra.mrb[0].mxu0 %v1364
    %v1366 = vpop.f32.mrb[0].mxu0
    %v1367 = vadd.f32 %v1293, %v1366
    %v1368 = vpop.f32.mrb[0].mxu0
    %1369 = vdwg.mxu0
    %1370 = vmatprep.subr.mxu0 0.0
    %v1371 = vand.u32 %v1142, 4294901760
    %1372 = vmatpush1.xpose.msra.mxu0 %v1371
    %1373 = vmatprep.subr.mxu0 0.0
    %1374 = vmatpush1.xpose.msra.mxu0 0.0
    %1375 = vmatprep.subr.mxu0 0.0
    %1376 = vmatpush1.xpose.msra.mxu0 0.0
    %1377 = vmatprep.subr.mxu0 0.0
    %1378 = vmatpush1.xpose.msra.mxu0 0.0
    %1379 = vmatprep.subr.mxu0 0.0
    %1380 = vmatpush1.xpose.msra.mxu0 0.0
    %1381 = vmatprep.subr.mxu0 0.0
    %1382 = vmatpush1.xpose.msra.mxu0 0.0
    %1383 = vmatprep.subr.mxu0 0.0
    %1384 = vmatpush1.xpose.msra.mxu0 0.0
    %1385 = vmatprep.subr.mxu0 0.0
    %1386 = vmatpush1.xpose.msra.mxu0 0.0
    %1387 = vmatprep.subr.mxu0 0.0
    %1388 = vmatpush1.xpose.msra.mxu0 0.0
    %1389 = vmatprep.subr.mxu0 0.0
    %1390 = vmatpush1.xpose.msra.mxu0 0.0
    %1391 = vmatprep.subr.mxu0 0.0
    %1392 = vmatpush1.xpose.msra.mxu0 0.0
    %1393 = vmatprep.subr.mxu0 0.0
    %1394 = vmatpush1.xpose.msra.mxu0 0.0
    %1395 = vmatprep.subr.mxu0 0.0
    %1396 = vmatpush1.xpose.msra.mxu0 0.0
    %1397 = vmatprep.subr.mxu0 0.0
    %1398 = vmatpush1.xpose.msra.mxu0 0.0
    %1399 = vmatprep.subr.mxu0 0.0
    %1400 = vmatpush1.xpose.msra.mxu0 0.0
    %1401 = vmatprep.subr.mxu0 0.0
    %1402 = vmatpush1.xpose.msra.mxu0 0.0
    %1403 = vmatprep.subr.mxu0 0.0
    %1404 = vmatpush1.xpose.msra.mxu0 0.0
    %1405 = vmatprep.subr.mxu0 0.0
    %1406 = vmatpush1.xpose.msra.mxu0 0.0
    %1407 = vmatprep.subr.mxu0 0.0
    %1408 = vmatpush1.xpose.msra.mxu0 0.0
    %1409 = vmatprep.subr.mxu0 0.0
    %1410 = vmatpush1.xpose.msra.mxu0 0.0
    %1411 = vmatprep.subr.mxu0 0.0
    %1412 = vmatpush1.xpose.msra.mxu0 0.0
    %1413 = vmatprep.subr.mxu0 0.0
    %1414 = vmatpush1.xpose.msra.mxu0 0.0
    %1415 = vmatprep.subr.mxu0 0.0
    %1416 = vmatpush1.xpose.msra.mxu0 0.0
    %1417 = vmatprep.subr.mxu0 0.0
    %1418 = vmatpush1.xpose.msra.mxu0 0.0
    %1419 = vmatprep.subr.mxu0 0.0
    %1420 = vmatpush1.xpose.msra.mxu0 0.0
    %1421 = vmatprep.subr.mxu0 0.0
    %1422 = vmatpush1.xpose.msra.mxu0 0.0
    %1423 = vmatprep.subr.mxu0 0.0
    %1424 = vmatpush1.xpose.msra.mxu0 0.0
    %1425 = vmatprep.subr.mxu0 0.0
    %1426 = vmatpush1.xpose.msra.mxu0 0.0
    %1427 = vmatprep.subr.mxu0 0.0
    %1428 = vmatpush1.xpose.msra.mxu0 0.0
    %1429 = vmatprep.subr.mxu0 0.0
    %1430 = vmatpush1.xpose.msra.mxu0 0.0
    %1431 = vmatprep.subr.mxu0 0.0
    %1432 = vmatpush1.xpose.msra.mxu0 0.0
    %1433 = vmatprep.subr.mxu0 0.0
    %1434 = vmatpush1.xpose.msra.mxu0 0.0
    %1435 = vmatprep.mubr.f32.mxu0 0.0
    %v1436 = vand.u32 %v1140, 4294901760
    %v1437 = vsub.f32 %v1140, %v1436
    %v1438 = vand.u32 %v1437, 4294901760
    %1439 = vmatmul.mubr.f32.gmra.mrb[0].mxu0 %v1438
    %v1440 = vpop.f32.mrb[0].mxu0
    %v1441 = vadd.f32 %v1367, %v1440
    %v1442 = vpop.f32.mrb[0].mxu0
    %1443 = vdwg.mxu0
    %1444 = vmatprep.subr.mxu0 0.0
    %v1445 = vand.u32 %v1142, 4294901760
    %v1446 = vsub.f32 %v1142, %v1445
    %v1447 = vand.u32 %v1446, 4294901760
    %1448 = vmatpush1.xpose.msra.mxu0 %v1447
    %1449 = vmatprep.subr.mxu0 0.0
    %1450 = vmatpush1.xpose.msra.mxu0 0.0
    %1451 = vmatprep.subr.mxu0 0.0
    %1452 = vmatpush1.xpose.msra.mxu0 0.0
    %1453 = vmatprep.subr.mxu0 0.0
    %1454 = vmatpush1.xpose.msra.mxu0 0.0
    %1455 = vmatprep.subr.mxu0 0.0
    %1456 = vmatpush1.xpose.msra.mxu0 0.0
    %1457 = vmatprep.subr.mxu0 0.0
    %1458 = vmatpush1.xpose.msra.mxu0 0.0
    %1459 = vmatprep.subr.mxu0 0.0
    %1460 = vmatpush1.xpose.msra.mxu0 0.0
    %1461 = vmatprep.subr.mxu0 0.0
    %1462 = vmatpush1.xpose.msra.mxu0 0.0
    %1463 = vmatprep.subr.mxu0 0.0
    %1464 = vmatpush1.xpose.msra.mxu0 0.0
    %1465 = vmatprep.subr.mxu0 0.0
    %1466 = vmatpush1.xpose.msra.mxu0 0.0
    %1467 = vmatprep.subr.mxu0 0.0
    %1468 = vmatpush1.xpose.msra.mxu0 0.0
    %1469 = vmatprep.subr.mxu0 0.0
    %1470 = vmatpush1.xpose.msra.mxu0 0.0
    %1471 = vmatprep.subr.mxu0 0.0
    %1472 = vmatpush1.xpose.msra.mxu0 0.0
    %1473 = vmatprep.subr.mxu0 0.0
    %1474 = vmatpush1.xpose.msra.mxu0 0.0
    %1475 = vmatprep.subr.mxu0 0.0
    %1476 = vmatpush1.xpose.msra.mxu0 0.0
    %1477 = vmatprep.subr.mxu0 0.0
    %1478 = vmatpush1.xpose.msra.mxu0 0.0
    %1479 = vmatprep.subr.mxu0 0.0
    %1480 = vmatpush1.xpose.msra.mxu0 0.0
    %1481 = vmatprep.subr.mxu0 0.0
    %1482 = vmatpush1.xpose.msra.mxu0 0.0
    %1483 = vmatprep.subr.mxu0 0.0
    %1484 = vmatpush1.xpose.msra.mxu0 0.0
    %1485 = vmatprep.subr.mxu0 0.0
    %1486 = vmatpush1.xpose.msra.mxu0 0.0
    %1487 = vmatprep.subr.mxu0 0.0
    %1488 = vmatpush1.xpose.msra.mxu0 0.0
    %1489 = vmatprep.subr.mxu0 0.0
    %1490 = vmatpush1.xpose.msra.mxu0 0.0
    %1491 = vmatprep.subr.mxu0 0.0
    %1492 = vmatpush1.xpose.msra.mxu0 0.0
    %1493 = vmatprep.subr.mxu0 0.0
    %1494 = vmatpush1.xpose.msra.mxu0 0.0
    %1495 = vmatprep.subr.mxu0 0.0
    %1496 = vmatpush1.xpose.msra.mxu0 0.0
    %1497 = vmatprep.subr.mxu0 0.0
    %1498 = vmatpush1.xpose.msra.mxu0 0.0
    %1499 = vmatprep.subr.mxu0 0.0
    %1500 = vmatpush1.xpose.msra.mxu0 0.0
    %1501 = vmatprep.subr.mxu0 0.0
    %1502 = vmatpush1.xpose.msra.mxu0 0.0
    %1503 = vmatprep.subr.mxu0 0.0
    %1504 = vmatpush1.xpose.msra.mxu0 0.0
    %1505 = vmatprep.subr.mxu0 0.0
    %1506 = vmatpush1.xpose.msra.mxu0 0.0
    %1507 = vmatprep.subr.mxu0 0.0
    %1508 = vmatpush1.xpose.msra.mxu0 0.0
    %1509 = vmatprep.subr.mxu0 0.0
    %1510 = vmatpush1.xpose.msra.mxu0 0.0
    %1511 = vmatprep.mubr.f32.mxu0 0.0
    %v1512 = vand.u32 %v1140, 4294901760
    %1513 = vmatmul.mubr.f32.gmra.mrb[0].mxu0 %v1512
    %v1514 = vpop.f32.mrb[0].mxu0
    %v1515 = vadd.f32 %v1441, %v1514
    %v1516 = vpop.f32.mrb[0].mxu0
    %1517 = vdwg.mxu0
    %1518 = vmatprep.subr.mxu0 0.0
    %v1519 = vand.u32 %v1142, 4294901760
    %1520 = vmatpush1.xpose.msra.mxu0 %v1519
    %1521 = vmatprep.subr.mxu0 0.0
    %1522 = vmatpush1.xpose.msra.mxu0 0.0
    %1523 = vmatprep.subr.mxu0 0.0
    %1524 = vmatpush1.xpose.msra.mxu0 0.0
    %1525 = vmatprep.subr.mxu0 0.0
    %1526 = vmatpush1.xpose.msra.mxu0 0.0
    %1527 = vmatprep.subr.mxu0 0.0
    %1528 = vmatpush1.xpose.msra.mxu0 0.0
    %1529 = vmatprep.subr.mxu0 0.0
    %1530 = vmatpush1.xpose.msra.mxu0 0.0
    %1531 = vmatprep.subr.mxu0 0.0
    %1532 = vmatpush1.xpose.msra.mxu0 0.0
    %1533 = vmatprep.subr.mxu0 0.0
    %1534 = vmatpush1.xpose.msra.mxu0 0.0
    %1535 = vmatprep.subr.mxu0 0.0
    %1536 = vmatpush1.xpose.msra.mxu0 0.0
    %1537 = vmatprep.subr.mxu0 0.0
    %1538 = vmatpush1.xpose.msra.mxu0 0.0
    %1539 = vmatprep.subr.mxu0 0.0
    %1540 = vmatpush1.xpose.msra.mxu0 0.0
    %1541 = vmatprep.subr.mxu0 0.0
    %1542 = vmatpush1.xpose.msra.mxu0 0.0
    %1543 = vmatprep.subr.mxu0 0.0
    %1544 = vmatpush1.xpose.msra.mxu0 0.0
    %1545 = vmatprep.subr.mxu0 0.0
    %1546 = vmatpush1.xpose.msra.mxu0 0.0
    %1547 = vmatprep.subr.mxu0 0.0
    %1548 = vmatpush1.xpose.msra.mxu0 0.0
    %1549 = vmatprep.subr.mxu0 0.0
    %1550 = vmatpush1.xpose.msra.mxu0 0.0
    %1551 = vmatprep.subr.mxu0 0.0
    %1552 = vmatpush1.xpose.msra.mxu0 0.0
    %1553 = vmatprep.subr.mxu0 0.0
    %1554 = vmatpush1.xpose.msra.mxu0 0.0
    %1555 = vmatprep.subr.mxu0 0.0
    %1556 = vmatpush1.xpose.msra.mxu0 0.0
    %1557 = vmatprep.subr.mxu0 0.0
    %1558 = vmatpush1.xpose.msra.mxu0 0.0
    %1559 = vmatprep.subr.mxu0 0.0
    %1560 = vmatpush1.xpose.msra.mxu0 0.0
    %1561 = vmatprep.subr.mxu0 0.0
    %1562 = vmatpush1.xpose.msra.mxu0 0.0
    %1563 = vmatprep.subr.mxu0 0.0
    %1564 = vmatpush1.xpose.msra.mxu0 0.0
    %1565 = vmatprep.subr.mxu0 0.0
    %1566 = vmatpush1.xpose.msra.mxu0 0.0
    %1567 = vmatprep.subr.mxu0 0.0
    %1568 = vmatpush1.xpose.msra.mxu0 0.0
    %1569 = vmatprep.subr.mxu0 0.0
    %1570 = vmatpush1.xpose.msra.mxu0 0.0
    %1571 = vmatprep.subr.mxu0 0.0
    %1572 = vmatpush1.xpose.msra.mxu0 0.0
    %1573 = vmatprep.subr.mxu0 0.0
    %1574 = vmatpush1.xpose.msra.mxu0 0.0
    %1575 = vmatprep.subr.mxu0 0.0
    %1576 = vmatpush1.xpose.msra.mxu0 0.0
    %1577 = vmatprep.subr.mxu0 0.0
    %1578 = vmatpush1.xpose.msra.mxu0 0.0
    %1579 = vmatprep.subr.mxu0 0.0
    %1580 = vmatpush1.xpose.msra.mxu0 0.0
    %1581 = vmatprep.subr.mxu0 0.0
    %1582 = vmatpush1.xpose.msra.mxu0 0.0
    %1583 = vmatprep.mubr.f32.mxu0 0.0
    %v1584 = vand.u32 %v1140, 4294901760
    %1585 = vmatmul.mubr.f32.gmra.mrb[0].mxu0 %v1584
    %v1586 = vpop.f32.mrb[0].mxu0
    %v1587 = vadd.f32 %v1515, %v1586
    %v1588 = vpop.f32.mrb[0].mxu0
    %1589 = vdwg.mxu0
    %vm1590 = vcmask 64512
    %v1591 = vsel %vm1590, %v1133, -inf
    %1592 = vmax.xlane.f32.xlu0 %v1591
    %v1593 = vpop.xlane.xlu0 %1592
    %v1594 = vsel %vm1590, %v1587, -inf
    %1595 = vmax.xlane.f32.xlu0 %v1594
    %v1596 = vpop.xlane.xlu0 %1595
    %v1597 = vsub.f32 %v1133, %v1593
    %v1598 = vsub.f32 %v1587, %v1596
    %v1599 = vmul.f32 %v1597, 1.442695
    %v1600 = vpow.pop %v1599
    %v1601 = vmul.f32 %v1598, 1.442695
    %v1602 = vpow.pop %v1601
    %v1603 = vsel %vm1590, %v1600, 0.0
    %1604 = vadd.xlane.f32.xlu0 %v1603
    %v1605 = vpop.xlane.xlu0 %1604
    %v1606 = vsel %vm1590, %v1602, 0.0
    %1607 = vadd.xlane.f32.xlu0 %v1606
    %v1608 = vpop.xlane.xlu0 %1607
    %v1609 = vrcp.pop %v1605
    %v1610 = vmul.f32 %v1600, %v1609
    %v1611 = vrcp.pop %v1608
    %v1612 = vmul.f32 %v1602, %v1611
    %1613 = vst.msk [vmem:[#allocation4] sm:$0xff] %vm1590, %v1610
    %1614 = vst.msk [vmem:[#allocation4 + $0x8] sm:$0xff] %vm1590, %v1612
    %1615 = vrot.lane.b32.xlu0 %v680, 64
    %v1616 = vpop.permute.xlu0 %1615
    %v1619 = vsel %vm1590, %v1610, 0
    %1621 = vmatprep.subr.mxu0 0.0
    %v1622 = vand.u32 %v1616, 4294901760
    %1623 = vmatpush1.msra.mxu0 %v1622
    %1624 = vmatprep.subr.mxu0 0.0
    %1625 = vmatpush1.msra.mxu0 0.0
    %1626 = vmatprep.subr.mxu0 0.0
    %1627 = vmatpush1.msra.mxu0 0.0
    %1628 = vmatprep.subr.mxu0 0.0
    %1629 = vmatpush1.msra.mxu0 0.0
    %1630 = vmatprep.subr.mxu0 0.0
    %1631 = vmatpush1.msra.mxu0 0.0
    %1632 = vmatprep.subr.mxu0 0.0
    %1633 = vmatpush1.msra.mxu0 0.0
    %1634 = vmatprep.subr.mxu0 0.0
    %1635 = vmatpush1.msra.mxu0 0.0
    %1636 = vmatprep.subr.mxu0 0.0
    %1637 = vmatpush1.msra.mxu0 0.0
    %1638 = vmatprep.subr.mxu0 0.0
    %1639 = vmatpush1.msra.mxu0 0.0
    %1640 = vmatprep.subr.mxu0 0.0
    %1641 = vmatpush1.msra.mxu0 0.0
    %1642 = vmatprep.subr.mxu0 0.0
    %1643 = vmatpush1.msra.mxu0 0.0
    %1644 = vmatprep.subr.mxu0 0.0
    %1645 = vmatpush1.msra.mxu0 0.0
    %1646 = vmatprep.subr.mxu0 0.0
    %1647 = vmatpush1.msra.mxu0 0.0
    %1648 = vmatprep.subr.mxu0 0.0
    %1649 = vmatpush1.msra.mxu0 0.0
    %1650 = vmatprep.subr.mxu0 0.0
    %1651 = vmatpush1.msra.mxu0 0.0
    %1652 = vmatprep.subr.mxu0 0.0
    %1653 = vmatpush1.msra.mxu0 0.0
    %1654 = vmatprep.subr.mxu0 0.0
    %1655 = vmatpush1.msra.mxu0 0.0
    %1656 = vmatprep.subr.mxu0 0.0
    %1657 = vmatpush1.msra.mxu0 0.0
    %1658 = vmatprep.subr.mxu0 0.0
    %1659 = vmatpush1.msra.mxu0 0.0
    %1660 = vmatprep.subr.mxu0 0.0
    %1661 = vmatpush1.msra.mxu0 0.0
    %1662 = vmatprep.subr.mxu0 0.0
    %1663 = vmatpush1.msra.mxu0 0.0
    %1664 = vmatprep.subr.mxu0 0.0
    %1665 = vmatpush1.msra.mxu0 0.0
    %1666 = vmatprep.subr.mxu0 0.0
    %1667 = vmatpush1.msra.mxu0 0.0
    %1668 = vmatprep.subr.mxu0 0.0
    %1669 = vmatpush1.msra.mxu0 0.0
    %1670 = vmatprep.subr.mxu0 0.0
    %1671 = vmatpush1.msra.mxu0 0.0
    %1672 = vmatprep.subr.mxu0 0.0
    %1673 = vmatpush1.msra.mxu0 0.0
    %1674 = vmatprep.subr.mxu0 0.0
    %1675 = vmatpush1.msra.mxu0 0.0
    %1676 = vmatprep.subr.mxu0 0.0
    %1677 = vmatpush1.msra.mxu0 0.0
    %1678 = vmatprep.subr.mxu0 0.0
    %1679 = vmatpush1.msra.mxu0 0.0
    %1680 = vmatprep.subr.mxu0 0.0
    %1681 = vmatpush1.msra.mxu0 0.0
    %1682 = vmatprep.subr.mxu0 0.0
    %1683 = vmatpush1.msra.mxu0 0.0
    %1684 = vmatprep.subr.mxu0 0.0
    %1685 = vmatpush1.msra.mxu0 0.0
    %1686 = vmatprep.mubr.f32.mxu0 0.0
    %v1687 = vand.u32 %v1619, 4294901760
    %v1688 = vsub.f32 %v1619, %v1687
    %v1689 = vand.u32 %v1688, 4294901760
    %v1690 = vsub.f32 %v1688, %v1689
    %v1691 = vand.u32 %v1690, 4294901760
    %1692 = vmatmul.mubr.f32.gmra.mrb[0].mxu0 %v1691
    %v1693 = vpop.f32.mrb[0].mxu0
    %v1694 = vadd.f32 0.0, %v1693
    %v1695 = vpop.f32.mrb[0].mxu0
    %1696 = vdwg.mxu0
    %1697 = vmatprep.subr.mxu0 0.0
    %v1698 = vand.u32 %v1616, 4294901760
    %v1699 = vsub.f32 %v1616, %v1698
    %v1700 = vand.u32 %v1699, 4294901760
    %v1701 = vsub.f32 %v1699, %v1700
    %v1702 = vand.u32 %v1701, 4294901760
    %1703 = vmatpush1.msra.mxu0 %v1702
    %1704 = vmatprep.subr.mxu0 0.0
    %1705 = vmatpush1.msra.mxu0 0.0
    %1706 = vmatprep.subr.mxu0 0.0
    %1707 = vmatpush1.msra.mxu0 0.0
    %1708 = vmatprep.subr.mxu0 0.0
    %1709 = vmatpush1.msra.mxu0 0.0
    %1710 = vmatprep.subr.mxu0 0.0
    %1711 = vmatpush1.msra.mxu0 0.0
    %1712 = vmatprep.subr.mxu0 0.0
    %1713 = vmatpush1.msra.mxu0 0.0
    %1714 = vmatprep.subr.mxu0 0.0
    %1715 = vmatpush1.msra.mxu0 0.0
    %1716 = vmatprep.subr.mxu0 0.0
    %1717 = vmatpush1.msra.mxu0 0.0
    %1718 = vmatprep.subr.mxu0 0.0
    %1719 = vmatpush1.msra.mxu0 0.0
    %1720 = vmatprep.subr.mxu0 0.0
    %1721 = vmatpush1.msra.mxu0 0.0
    %1722 = vmatprep.subr.mxu0 0.0
    %1723 = vmatpush1.msra.mxu0 0.0
    %1724 = vmatprep.subr.mxu0 0.0
    %1725 = vmatpush1.msra.mxu0 0.0
    %1726 = vmatprep.subr.mxu0 0.0
    %1727 = vmatpush1.msra.mxu0 0.0
    %1728 = vmatprep.subr.mxu0 0.0
    %1729 = vmatpush1.msra.mxu0 0.0
    %1730 = vmatprep.subr.mxu0 0.0
    %1731 = vmatpush1.msra.mxu0 0.0
    %1732 = vmatprep.subr.mxu0 0.0
    %1733 = vmatpush1.msra.mxu0 0.0
    %1734 = vmatprep.subr.mxu0 0.0
    %1735 = vmatpush1.msra.mxu0 0.0
    %1736 = vmatprep.subr.mxu0 0.0
    %1737 = vmatpush1.msra.mxu0 0.0
    %1738 = vmatprep.subr.mxu0 0.0
    %1739 = vmatpush1.msra.mxu0 0.0
    %1740 = vmatprep.subr.mxu0 0.0
    %1741 = vmatpush1.msra.mxu0 0.0
    %1742 = vmatprep.subr.mxu0 0.0
    %1743 = vmatpush1.msra.mxu0 0.0
    %1744 = vmatprep.subr.mxu0 0.0
    %1745 = vmatpush1.msra.mxu0 0.0
    %1746 = vmatprep.subr.mxu0 0.0
    %1747 = vmatpush1.msra.mxu0 0.0
    %1748 = vmatprep.subr.mxu0 0.0
    %1749 = vmatpush1.msra.mxu0 0.0
    %1750 = vmatprep.subr.mxu0 0.0
    %1751 = vmatpush1.msra.mxu0 0.0
    %1752 = vmatprep.subr.mxu0 0.0
    %1753 = vmatpush1.msra.mxu0 0.0
    %1754 = vmatprep.subr.mxu0 0.0
    %1755 = vmatpush1.msra.mxu0 0.0
    %1756 = vmatprep.subr.mxu0 0.0
    %1757 = vmatpush1.msra.mxu0 0.0
    %1758 = vmatprep.subr.mxu0 0.0
    %1759 = vmatpush1.msra.mxu0 0.0
    %1760 = vmatprep.subr.mxu0 0.0
    %1761 = vmatpush1.msra.mxu0 0.0
    %1762 = vmatprep.subr.mxu0 0.0
    %1763 = vmatpush1.msra.mxu0 0.0
    %1764 = vmatprep.subr.mxu0 0.0
    %1765 = vmatpush1.msra.mxu0 0.0
    %1766 = vmatprep.mubr.f32.mxu0 0.0
    %v1767 = vand.u32 %v1619, 4294901760
    %1768 = vmatmul.mubr.f32.gmra.mrb[0].mxu0 %v1767
    %v1769 = vpop.f32.mrb[0].mxu0
    %v1770 = vadd.f32 %v1694, %v1769
    %v1771 = vpop.f32.mrb[0].mxu0
    %1772 = vdwg.mxu0
    %1773 = vmatprep.subr.mxu0 0.0
    %v1774 = vand.u32 %v1616, 4294901760
    %v1775 = vsub.f32 %v1616, %v1774
    %1776 = vmatpush1.msra.mxu0 %v1775
    %1777 = vmatprep.subr.mxu0 0.0
    %1778 = vmatpush1.msra.mxu0 0.0
    %1779 = vmatprep.subr.mxu0 0.0
    %1780 = vmatpush1.msra.mxu0 0.0
    %1781 = vmatprep.subr.mxu0 0.0
    %1782 = vmatpush1.msra.mxu0 0.0
    %1783 = vmatprep.subr.mxu0 0.0
    %1784 = vmatpush1.msra.mxu0 0.0
    %1785 = vmatprep.subr.mxu0 0.0
    %1786 = vmatpush1.msra.mxu0 0.0
    %1787 = vmatprep.subr.mxu0 0.0
    %1788 = vmatpush1.msra.mxu0 0.0
    %1789 = vmatprep.subr.mxu0 0.0
    %1790 = vmatpush1.msra.mxu0 0.0
    %1791 = vmatprep.subr.mxu0 0.0
    %1792 = vmatpush1.msra.mxu0 0.0
    %1793 = vmatprep.subr.mxu0 0.0
    %1794 = vmatpush1.msra.mxu0 0.0
    %1795 = vmatprep.subr.mxu0 0.0
    %1796 = vmatpush1.msra.mxu0 0.0
    %1797 = vmatprep.subr.mxu0 0.0
    %1798 = vmatpush1.msra.mxu0 0.0
    %1799 = vmatprep.subr.mxu0 0.0
    %1800 = vmatpush1.msra.mxu0 0.0
    %1801 = vmatprep.subr.mxu0 0.0
    %1802 = vmatpush1.msra.mxu0 0.0
    %1803 = vmatprep.subr.mxu0 0.0
    %1804 = vmatpush1.msra.mxu0 0.0
    %1805 = vmatprep.subr.mxu0 0.0
    %1806 = vmatpush1.msra.mxu0 0.0
    %1807 = vmatprep.subr.mxu0 0.0
    %1808 = vmatpush1.msra.mxu0 0.0
    %1809 = vmatprep.subr.mxu0 0.0
    %1810 = vmatpush1.msra.mxu0 0.0
    %1811 = vmatprep.subr.mxu0 0.0
    %1812 = vmatpush1.msra.mxu0 0.0
    %1813 = vmatprep.subr.mxu0 0.0
    %1814 = vmatpush1.msra.mxu0 0.0
    %1815 = vmatprep.subr.mxu0 0.0
    %1816 = vmatpush1.msra.mxu0 0.0
    %1817 = vmatprep.subr.mxu0 0.0
    %1818 = vmatpush1.msra.mxu0 0.0
    %1819 = vmatprep.subr.mxu0 0.0
    %1820 = vmatpush1.msra.mxu0 0.0
    %1821 = vmatprep.subr.mxu0 0.0
    %1822 = vmatpush1.msra.mxu0 0.0
    %1823 = vmatprep.subr.mxu0 0.0
    %1824 = vmatpush1.msra.mxu0 0.0
    %1825 = vmatprep.subr.mxu0 0.0
    %1826 = vmatpush1.msra.mxu0 0.0
    %1827 = vmatprep.subr.mxu0 0.0
    %1828 = vmatpush1.msra.mxu0 0.0
    %1829 = vmatprep.subr.mxu0 0.0
    %1830 = vmatpush1.msra.mxu0 0.0
    %1831 = vmatprep.subr.mxu0 0.0
    %1832 = vmatpush1.msra.mxu0 0.0
    %1833 = vmatprep.subr.mxu0 0.0
    %1834 = vmatpush1.msra.mxu0 0.0
    %1835 = vmatprep.subr.mxu0 0.0
    %1836 = vmatpush1.msra.mxu0 0.0
    %1837 = vmatprep.subr.mxu0 0.0
    %1838 = vmatpush1.msra.mxu0 0.0
    %1839 = vmatprep.mubr.f32.mxu0 0.0
    %v1840 = vand.u32 %v1619, 4294901760
    %v1841 = vsub.f32 %v1619, %v1840
    %1842 = vmatmul.mubr.f32.gmra.mrb[0].mxu0 %v1841
    %v1843 = vpop.f32.mrb[0].mxu0
    %v1844 = vadd.f32 %v1770, %v1843
    %v1845 = vpop.f32.mrb[0].mxu0
    %1846 = vdwg.mxu0
    %1847 = vmatprep.subr.mxu0 0.0
    %v1848 = vand.u32 %v1616, 4294901760
    %1849 = vmatpush1.msra.mxu0 %v1848
    %1850 = vmatprep.subr.mxu0 0.0
    %1851 = vmatpush1.msra.mxu0 0.0
    %1852 = vmatprep.subr.mxu0 0.0
    %1853 = vmatpush1.msra.mxu0 0.0
    %1854 = vmatprep.subr.mxu0 0.0
    %1855 = vmatpush1.msra.mxu0 0.0
    %1856 = vmatprep.subr.mxu0 0.0
    %1857 = vmatpush1.msra.mxu0 0.0
    %1858 = vmatprep.subr.mxu0 0.0
    %1859 = vmatpush1.msra.mxu0 0.0
    %1860 = vmatprep.subr.mxu0 0.0
    %1861 = vmatpush1.msra.mxu0 0.0
    %1862 = vmatprep.subr.mxu0 0.0
    %1863 = vmatpush1.msra.mxu0 0.0
    %1864 = vmatprep.subr.mxu0 0.0
    %1865 = vmatpush1.msra.mxu0 0.0
    %1866 = vmatprep.subr.mxu0 0.0
    %1867 = vmatpush1.msra.mxu0 0.0
    %1868 = vmatprep.subr.mxu0 0.0
    %1869 = vmatpush1.msra.mxu0 0.0
    %1870 = vmatprep.subr.mxu0 0.0
    %1871 = vmatpush1.msra.mxu0 0.0
    %1872 = vmatprep.subr.mxu0 0.0
    %1873 = vmatpush1.msra.mxu0 0.0
    %1874 = vmatprep.subr.mxu0 0.0
    %1875 = vmatpush1.msra.mxu0 0.0
    %1876 = vmatprep.subr.mxu0 0.0
    %1877 = vmatpush1.msra.mxu0 0.0
    %1878 = vmatprep.subr.mxu0 0.0
    %1879 = vmatpush1.msra.mxu0 0.0
    %1880 = vmatprep.subr.mxu0 0.0
    %1881 = vmatpush1.msra.mxu0 0.0
    %1882 = vmatprep.subr.mxu0 0.0
    %1883 = vmatpush1.msra.mxu0 0.0
    %1884 = vmatprep.subr.mxu0 0.0
    %1885 = vmatpush1.msra.mxu0 0.0
    %1886 = vmatprep.subr.mxu0 0.0
    %1887 = vmatpush1.msra.mxu0 0.0
    %1888 = vmatprep.subr.mxu0 0.0
    %1889 = vmatpush1.msra.mxu0 0.0
    %1890 = vmatprep.subr.mxu0 0.0
    %1891 = vmatpush1.msra.mxu0 0.0
    %1892 = vmatprep.subr.mxu0 0.0
    %1893 = vmatpush1.msra.mxu0 0.0
    %1894 = vmatprep.subr.mxu0 0.0
    %1895 = vmatpush1.msra.mxu0 0.0
    %1896 = vmatprep.subr.mxu0 0.0
    %1897 = vmatpush1.msra.mxu0 0.0
    %1898 = vmatprep.subr.mxu0 0.0
    %1899 = vmatpush1.msra.mxu0 0.0
    %1900 = vmatprep.subr.mxu0 0.0
    %1901 = vmatpush1.msra.mxu0 0.0
    %1902 = vmatprep.subr.mxu0 0.0
    %1903 = vmatpush1.msra.mxu0 0.0
    %1904 = vmatprep.subr.mxu0 0.0
    %1905 = vmatpush1.msra.mxu0 0.0
    %1906 = vmatprep.subr.mxu0 0.0
    %1907 = vmatpush1.msra.mxu0 0.0
    %1908 = vmatprep.subr.mxu0 0.0
    %1909 = vmatpush1.msra.mxu0 0.0
    %1910 = vmatprep.subr.mxu0 0.0
    %1911 = vmatpush1.msra.mxu0 0.0
    %1912 = vmatprep.mubr.f32.mxu0 0.0
    %v1913 = vand.u32 %v1619, 4294901760
    %v1914 = vsub.f32 %v1619, %v1913
    %v1915 = vand.u32 %v1914, 4294901760
    %1916 = vmatmul.mubr.f32.gmra.mrb[0].mxu0 %v1915
    %v1917 = vpop.f32.mrb[0].mxu0
    %v1918 = vadd.f32 %v1844, %v1917
    %v1919 = vpop.f32.mrb[0].mxu0
    %1920 = vdwg.mxu0
    %1921 = vmatprep.subr.mxu0 0.0
    %v1922 = vand.u32 %v1616, 4294901760
    %v1923 = vsub.f32 %v1616, %v1922
    %v1924 = vand.u32 %v1923, 4294901760
    %1925 = vmatpush1.msra.mxu0 %v1924
    %1926 = vmatprep.subr.mxu0 0.0
    %1927 = vmatpush1.msra.mxu0 0.0
    %1928 = vmatprep.subr.mxu0 0.0
    %1929 = vmatpush1.msra.mxu0 0.0
    %1930 = vmatprep.subr.mxu0 0.0
    %1931 = vmatpush1.msra.mxu0 0.0
    %1932 = vmatprep.subr.mxu0 0.0
    %1933 = vmatpush1.msra.mxu0 0.0
    %1934 = vmatprep.subr.mxu0 0.0
    %1935 = vmatpush1.msra.mxu0 0.0
    %1936 = vmatprep.subr.mxu0 0.0
    %1937 = vmatpush1.msra.mxu0 0.0
    %1938 = vmatprep.subr.mxu0 0.0
    %1939 = vmatpush1.msra.mxu0 0.0
    %1940 = vmatprep.subr.mxu0 0.0
    %1941 = vmatpush1.msra.mxu0 0.0
    %1942 = vmatprep.subr.mxu0 0.0
    %1943 = vmatpush1.msra.mxu0 0.0
    %1944 = vmatprep.subr.mxu0 0.0
    %1945 = vmatpush1.msra.mxu0 0.0
    %1946 = vmatprep.subr.mxu0 0.0
    %1947 = vmatpush1.msra.mxu0 0.0
    %1948 = vmatprep.subr.mxu0 0.0
    %1949 = vmatpush1.msra.mxu0 0.0
    %1950 = vmatprep.subr.mxu0 0.0
    %1951 = vmatpush1.msra.mxu0 0.0
    %1952 = vmatprep.subr.mxu0 0.0
    %1953 = vmatpush1.msra.mxu0 0.0
    %1954 = vmatprep.subr.mxu0 0.0
    %1955 = vmatpush1.msra.mxu0 0.0
    %1956 = vmatprep.subr.mxu0 0.0
    %1957 = vmatpush1.msra.mxu0 0.0
    %1958 = vmatprep.subr.mxu0 0.0
    %1959 = vmatpush1.msra.mxu0 0.0
    %1960 = vmatprep.subr.mxu0 0.0
    %1961 = vmatpush1.msra.mxu0 0.0
    %1962 = vmatprep.subr.mxu0 0.0
    %1963 = vmatpush1.msra.mxu0 0.0
    %1964 = vmatprep.subr.mxu0 0.0
    %1965 = vmatpush1.msra.mxu0 0.0
    %1966 = vmatprep.subr.mxu0 0.0
    %1967 = vmatpush1.msra.mxu0 0.0
    %1968 = vmatprep.subr.mxu0 0.0
    %1969 = vmatpush1.msra.mxu0 0.0
    %1970 = vmatprep.subr.mxu0 0.0
    %1971 = vmatpush1.msra.mxu0 0.0
    %1972 = vmatprep.subr.mxu0 0.0
    %1973 = vmatpush1.msra.mxu0 0.0
    %1974 = vmatprep.subr.mxu0 0.0
    %1975 = vmatpush1.msra.mxu0 0.0
    %1976 = vmatprep.subr.mxu0 0.0
    %1977 = vmatpush1.msra.mxu0 0.0
    %1978 = vmatprep.subr.mxu0 0.0
    %1979 = vmatpush1.msra.mxu0 0.0
    %1980 = vmatprep.subr.mxu0 0.0
    %1981 = vmatpush1.msra.mxu0 0.0
    %1982 = vmatprep.subr.mxu0 0.0
    %1983 = vmatpush1.msra.mxu0 0.0
    %1984 = vmatprep.subr.mxu0 0.0
    %1985 = vmatpush1.msra.mxu0 0.0
    %1986 = vmatprep.subr.mxu0 0.0
    %1987 = vmatpush1.msra.mxu0 0.0
    %1988 = vmatprep.mubr.f32.mxu0 0.0
    %v1989 = vand.u32 %v1619, 4294901760
    %1990 = vmatmul.mubr.f32.gmra.mrb[0].mxu0 %v1989
    %v1991 = vpop.f32.mrb[0].mxu0
    %v1992 = vadd.f32 %v1918, %v1991
    %v1993 = vpop.f32.mrb[0].mxu0
    %1994 = vdwg.mxu0
    %1995 = vmatprep.subr.mxu0 0.0
    %v1996 = vand.u32 %v1616, 4294901760
    %1997 = vmatpush1.msra.mxu0 %v1996
    %1998 = vmatprep.subr.mxu0 0.0
    %1999 = vmatpush1.msra.mxu0 0.0
    %2000 = vmatprep.subr.mxu0 0.0
    %2001 = vmatpush1.msra.mxu0 0.0
    %2002 = vmatprep.subr.mxu0 0.0
    %2003 = vmatpush1.msra.mxu0 0.0
    %2004 = vmatprep.subr.mxu0 0.0
    %2005 = vmatpush1.msra.mxu0 0.0
    %2006 = vmatprep.subr.mxu0 0.0
    %2007 = vmatpush1.msra.mxu0 0.0
    %2008 = vmatprep.subr.mxu0 0.0
    %2009 = vmatpush1.msra.mxu0 0.0
    %2010 = vmatprep.subr.mxu0 0.0
    %2011 = vmatpush1.msra.mxu0 0.0
    %2012 = vmatprep.subr.mxu0 0.0
    %2013 = vmatpush1.msra.mxu0 0.0
    %2014 = vmatprep.subr.mxu0 0.0
    %2015 = vmatpush1.msra.mxu0 0.0
    %2016 = vmatprep.subr.mxu0 0.0
    %2017 = vmatpush1.msra.mxu0 0.0
    %2018 = vmatprep.subr.mxu0 0.0
    %2019 = vmatpush1.msra.mxu0 0.0
    %2020 = vmatprep.subr.mxu0 0.0
    %2021 = vmatpush1.msra.mxu0 0.0
    %2022 = vmatprep.subr.mxu0 0.0
    %2023 = vmatpush1.msra.mxu0 0.0
    %2024 = vmatprep.subr.mxu0 0.0
    %2025 = vmatpush1.msra.mxu0 0.0
    %2026 = vmatprep.subr.mxu0 0.0
    %2027 = vmatpush1.msra.mxu0 0.0
    %2028 = vmatprep.subr.mxu0 0.0
    %2029 = vmatpush1.msra.mxu0 0.0
    %2030 = vmatprep.subr.mxu0 0.0
    %2031 = vmatpush1.msra.mxu0 0.0
    %2032 = vmatprep.subr.mxu0 0.0
    %2033 = vmatpush1.msra.mxu0 0.0
    %2034 = vmatprep.subr.mxu0 0.0
    %2035 = vmatpush1.msra.mxu0 0.0
    %2036 = vmatprep.subr.mxu0 0.0
    %2037 = vmatpush1.msra.mxu0 0.0
    %2038 = vmatprep.subr.mxu0 0.0
    %2039 = vmatpush1.msra.mxu0 0.0
    %2040 = vmatprep.subr.mxu0 0.0
    %2041 = vmatpush1.msra.mxu0 0.0
    %2042 = vmatprep.subr.mxu0 0.0
    %2043 = vmatpush1.msra.mxu0 0.0
    %2044 = vmatprep.subr.mxu0 0.0
    %2045 = vmatpush1.msra.mxu0 0.0
    %2046 = vmatprep.subr.mxu0 0.0
    %2047 = vmatpush1.msra.mxu0 0.0
    %2048 = vmatprep.subr.mxu0 0.0
    %2049 = vmatpush1.msra.mxu0 0.0
    %2050 = vmatprep.subr.mxu0 0.0
    %2051 = vmatpush1.msra.mxu0 0.0
    %2052 = vmatprep.subr.mxu0 0.0
    %2053 = vmatpush1.msra.mxu0 0.0
    %2054 = vmatprep.subr.mxu0 0.0
    %2055 = vmatpush1.msra.mxu0 0.0
    %2056 = vmatprep.subr.mxu0 0.0
    %2057 = vmatpush1.msra.mxu0 0.0
    %2058 = vmatprep.subr.mxu0 0.0
    %2059 = vmatpush1.msra.mxu0 0.0
    %2060 = vmatprep.mubr.f32.mxu0 0.0
    %v2061 = vand.u32 %v1619, 4294901760
    %2062 = vmatmul.mubr.f32.gmra.mrb[0].mxu0 %v2061
    %v2063 = vpop.f32.mrb[0].mxu0
    %v2064 = vadd.f32 %v1992, %v2063
    %v2065 = vpop.f32.mrb[0].mxu0
    %2066 = vdwg.mxu0
    %2067 = vrot.lane.b32.xlu0 %v681, 64
    %v2068 = vpop.permute.xlu0 %2067
    %v2071 = vsel %vm1590, %v1612, 0
    %2073 = vmatprep.subr.mxu0 0.0
    %v2074 = vand.u32 %v2068, 4294901760
    %2075 = vmatpush1.msra.mxu0 %v2074
    %2076 = vmatprep.subr.mxu0 0.0
    %2077 = vmatpush1.msra.mxu0 0.0
    %2078 = vmatprep.subr.mxu0 0.0
    %2079 = vmatpush1.msra.mxu0 0.0
    %2080 = vmatprep.subr.mxu0 0.0
    %2081 = vmatpush1.msra.mxu0 0.0
    %2082 = vmatprep.subr.mxu0 0.0
    %2083 = vmatpush1.msra.mxu0 0.0
    %2084 = vmatprep.subr.mxu0 0.0
    %2085 = vmatpush1.msra.mxu0 0.0
    %2086 = vmatprep.subr.mxu0 0.0
    %2087 = vmatpush1.msra.mxu0 0.0
    %2088 = vmatprep.subr.mxu0 0.0
    %2089 = vmatpush1.msra.mxu0 0.0
    %2090 = vmatprep.subr.mxu0 0.0
    %2091 = vmatpush1.msra.mxu0 0.0
    %2092 = vmatprep.subr.mxu0 0.0
    %2093 = vmatpush1.msra.mxu0 0.0
    %2094 = vmatprep.subr.mxu0 0.0
    %2095 = vmatpush1.msra.mxu0 0.0
    %2096 = vmatprep.subr.mxu0 0.0
    %2097 = vmatpush1.msra.mxu0 0.0
    %2098 = vmatprep.subr.mxu0 0.0
    %2099 = vmatpush1.msra.mxu0 0.0
    %2100 = vmatprep.subr.mxu0 0.0
    %2101 = vmatpush1.msra.mxu0 0.0
    %2102 = vmatprep.subr.mxu0 0.0
    %2103 = vmatpush1.msra.mxu0 0.0
    %2104 = vmatprep.subr.mxu0 0.0
    %2105 = vmatpush1.msra.mxu0 0.0
    %2106 = vmatprep.subr.mxu0 0.0
    %2107 = vmatpush1.msra.mxu0 0.0
    %2108 = vmatprep.subr.mxu0 0.0
    %2109 = vmatpush1.msra.mxu0 0.0
    %2110 = vmatprep.subr.mxu0 0.0
    %2111 = vmatpush1.msra.mxu0 0.0
    %2112 = vmatprep.subr.mxu0 0.0
    %2113 = vmatpush1.msra.mxu0 0.0
    %2114 = vmatprep.subr.mxu0 0.0
    %2115 = vmatpush1.msra.mxu0 0.0
    %2116 = vmatprep.subr.mxu0 0.0
    %2117 = vmatpush1.msra.mxu0 0.0
    %2118 = vmatprep.subr.mxu0 0.0
    %2119 = vmatpush1.msra.mxu0 0.0
    %2120 = vmatprep.subr.mxu0 0.0
    %2121 = vmatpush1.msra.mxu0 0.0
    %2122 = vmatprep.subr.mxu0 0.0
    %2123 = vmatpush1.msra.mxu0 0.0
    %2124 = vmatprep.subr.mxu0 0.0
    %2125 = vmatpush1.msra.mxu0 0.0
    %2126 = vmatprep.subr.mxu0 0.0
    %2127 = vmatpush1.msra.mxu0 0.0
    %2128 = vmatprep.subr.mxu0 0.0
    %2129 = vmatpush1.msra.mxu0 0.0
    %2130 = vmatprep.subr.mxu0 0.0
    %2131 = vmatpush1.msra.mxu0 0.0
    %2132 = vmatprep.subr.mxu0 0.0
    %2133 = vmatpush1.msra.mxu0 0.0
    %2134 = vmatprep.subr.mxu0 0.0
    %2135 = vmatpush1.msra.mxu0 0.0
    %2136 = vmatprep.subr.mxu0 0.0
    %2137 = vmatpush1.msra.mxu0 0.0
    %2138 = vmatprep.mubr.f32.mxu0 0.0
    %v2139 = vand.u32 %v2071, 4294901760
    %v2140 = vsub.f32 %v2071, %v2139
    %v2141 = vand.u32 %v2140, 4294901760
    %v2142 = vsub.f32 %v2140, %v2141
    %v2143 = vand.u32 %v2142, 4294901760
    %2144 = vmatmul.mubr.f32.gmra.mrb[0].mxu0 %v2143
    %v2145 = vpop.f32.mrb[0].mxu0
    %v2146 = vadd.f32 0.0, %v2145
    %v2147 = vpop.f32.mrb[0].mxu0
    %2148 = vdwg.mxu0
    %2149 = vmatprep.subr.mxu0 0.0
    %v2150 = vand.u32 %v2068, 4294901760
    %v2151 = vsub.f32 %v2068, %v2150
    %v2152 = vand.u32 %v2151, 4294901760
    %v2153 = vsub.f32 %v2151, %v2152
    %v2154 = vand.u32 %v2153, 4294901760
    %2155 = vmatpush1.msra.mxu0 %v2154
    %2156 = vmatprep.subr.mxu0 0.0
    %2157 = vmatpush1.msra.mxu0 0.0
    %2158 = vmatprep.subr.mxu0 0.0
    %2159 = vmatpush1.msra.mxu0 0.0
    %2160 = vmatprep.subr.mxu0 0.0
    %2161 = vmatpush1.msra.mxu0 0.0
    %2162 = vmatprep.subr.mxu0 0.0
    %2163 = vmatpush1.msra.mxu0 0.0
    %2164 = vmatprep.subr.mxu0 0.0
    %2165 = vmatpush1.msra.mxu0 0.0
    %2166 = vmatprep.subr.mxu0 0.0
    %2167 = vmatpush1.msra.mxu0 0.0
    %2168 = vmatprep.subr.mxu0 0.0
    %2169 = vmatpush1.msra.mxu0 0.0
    %2170 = vmatprep.subr.mxu0 0.0
    %2171 = vmatpush1.msra.mxu0 0.0
    %2172 = vmatprep.subr.mxu0 0.0
    %2173 = vmatpush1.msra.mxu0 0.0
    %2174 = vmatprep.subr.mxu0 0.0
    %2175 = vmatpush1.msra.mxu0 0.0
    %2176 = vmatprep.subr.mxu0 0.0
    %2177 = vmatpush1.msra.mxu0 0.0
    %2178 = vmatprep.subr.mxu0 0.0
    %2179 = vmatpush1.msra.mxu0 0.0
    %2180 = vmatprep.subr.mxu0 0.0
    %2181 = vmatpush1.msra.mxu0 0.0
    %2182 = vmatprep.subr.mxu0 0.0
    %2183 = vmatpush1.msra.mxu0 0.0
    %2184 = vmatprep.subr.mxu0 0.0
    %2185 = vmatpush1.msra.mxu0 0.0
    %2186 = vmatprep.subr.mxu0 0.0
    %2187 = vmatpush1.msra.mxu0 0.0
    %2188 = vmatprep.subr.mxu0 0.0
    %2189 = vmatpush1.msra.mxu0 0.0
    %2190 = vmatprep.subr.mxu0 0.0
    %2191 = vmatpush1.msra.mxu0 0.0
    %2192 = vmatprep.subr.mxu0 0.0
    %2193 = vmatpush1.msra.mxu0 0.0
    %2194 = vmatprep.subr.mxu0 0.0
    %2195 = vmatpush1.msra.mxu0 0.0
    %2196 = vmatprep.subr.mxu0 0.0
    %2197 = vmatpush1.msra.mxu0 0.0
    %2198 = vmatprep.subr.mxu0 0.0
    %2199 = vmatpush1.msra.mxu0 0.0
    %2200 = vmatprep.subr.mxu0 0.0
    %2201 = vmatpush1.msra.mxu0 0.0
    %2202 = vmatprep.subr.mxu0 0.0
    %2203 = vmatpush1.msra.mxu0 0.0
    %2204 = vmatprep.subr.mxu0 0.0
    %2205 = vmatpush1.msra.mxu0 0.0
    %2206 = vmatprep.subr.mxu0 0.0
    %2207 = vmatpush1.msra.mxu0 0.0
    %2208 = vmatprep.subr.mxu0 0.0
    %2209 = vmatpush1.msra.mxu0 0.0
    %2210 = vmatprep.subr.mxu0 0.0
    %2211 = vmatpush1.msra.mxu0 0.0
    %2212 = vmatprep.subr.mxu0 0.0
    %2213 = vmatpush1.msra.mxu0 0.0
    %2214 = vmatprep.subr.mxu0 0.0
    %2215 = vmatpush1.msra.mxu0 0.0
    %2216 = vmatprep.subr.mxu0 0.0
    %2217 = vmatpush1.msra.mxu0 0.0
    %2218 = vmatprep.mubr.f32.mxu0 0.0
    %v2219 = vand.u32 %v2071, 4294901760
    %2220 = vmatmul.mubr.f32.gmra.mrb[0].mxu0 %v2219
    %v2221 = vpop.f32.mrb[0].mxu0
    %v2222 = vadd.f32 %v2146, %v2221
    %v2223 = vpop.f32.mrb[0].mxu0
    %2224 = vdwg.mxu0
    %2225 = vmatprep.subr.mxu0 0.0
    %v2226 = vand.u32 %v2068, 4294901760
    %v2227 = vsub.f32 %v2068, %v2226
    %2228 = vmatpush1.msra.mxu0 %v2227
    %2229 = vmatprep.subr.mxu0 0.0
    %2230 = vmatpush1.msra.mxu0 0.0
    %2231 = vmatprep.subr.mxu0 0.0
    %2232 = vmatpush1.msra.mxu0 0.0
    %2233 = vmatprep.subr.mxu0 0.0
    %2234 = vmatpush1.msra.mxu0 0.0
    %2235 = vmatprep.subr.mxu0 0.0
    %2236 = vmatpush1.msra.mxu0 0.0
    %2237 = vmatprep.subr.mxu0 0.0
    %2238 = vmatpush1.msra.mxu0 0.0
    %2239 = vmatprep.subr.mxu0 0.0
    %2240 = vmatpush1.msra.mxu0 0.0
    %2241 = vmatprep.subr.mxu0 0.0
    %2242 = vmatpush1.msra.mxu0 0.0
    %2243 = vmatprep.subr.mxu0 0.0
    %2244 = vmatpush1.msra.mxu0 0.0
    %2245 = vmatprep.subr.mxu0 0.0
    %2246 = vmatpush1.msra.mxu0 0.0
    %2247 = vmatprep.subr.mxu0 0.0
    %2248 = vmatpush1.msra.mxu0 0.0
    %2249 = vmatprep.subr.mxu0 0.0
    %2250 = vmatpush1.msra.mxu0 0.0
    %2251 = vmatprep.subr.mxu0 0.0
    %2252 = vmatpush1.msra.mxu0 0.0
    %2253 = vmatprep.subr.mxu0 0.0
    %2254 = vmatpush1.msra.mxu0 0.0
    %2255 = vmatprep.subr.mxu0 0.0
    %2256 = vmatpush1.msra.mxu0 0.0
    %2257 = vmatprep.subr.mxu0 0.0
    %2258 = vmatpush1.msra.mxu0 0.0
    %2259 = vmatprep.subr.mxu0 0.0
    %2260 = vmatpush1.msra.mxu0 0.0
    %2261 = vmatprep.subr.mxu0 0.0
    %2262 = vmatpush1.msra.mxu0 0.0
    %2263 = vmatprep.subr.mxu0 0.0
    %2264 = vmatpush1.msra.mxu0 0.0
    %2265 = vmatprep.subr.mxu0 0.0
    %2266 = vmatpush1.msra.mxu0 0.0
    %2267 = vmatprep.subr.mxu0 0.0
    %2268 = vmatpush1.msra.mxu0 0.0
    %2269 = vmatprep.subr.mxu0 0.0
    %2270 = vmatpush1.msra.mxu0 0.0
    %2271 = vmatprep.subr.mxu0 0.0
    %2272 = vmatpush1.msra.mxu0 0.0
    %2273 = vmatprep.subr.mxu0 0.0
    %2274 = vmatpush1.msra.mxu0 0.0
    %2275 = vmatprep.subr.mxu0 0.0
    %2276 = vmatpush1.msra.mxu0 0.0
    %2277 = vmatprep.subr.mxu0 0.0
    %2278 = vmatpush1.msra.mxu0 0.0
    %2279 = vmatprep.subr.mxu0 0.0
    %2280 = vmatpush1.msra.mxu0 0.0
    %2281 = vmatprep.subr.mxu0 0.0
    %2282 = vmatpush1.msra.mxu0 0.0
    %2283 = vmatprep.subr.mxu0 0.0
    %2284 = vmatpush1.msra.mxu0 0.0
    %2285 = vmatprep.subr.mxu0 0.0
    %2286 = vmatpush1.msra.mxu0 0.0
    %2287 = vmatprep.subr.mxu0 0.0
    %2288 = vmatpush1.msra.mxu0 0.0
    %2289 = vmatprep.subr.mxu0 0.0
    %2290 = vmatpush1.msra.mxu0 0.0
    %2291 = vmatprep.mubr.f32.mxu0 0.0
    %v2292 = vand.u32 %v2071, 4294901760
    %v2293 = vsub.f32 %v2071, %v2292
    %2294 = vmatmul.mubr.f32.gmra.mrb[0].mxu0 %v2293
    %v2295 = vpop.f32.mrb[0].mxu0
    %v2296 = vadd.f32 %v2222, %v2295
    %v2297 = vpop.f32.mrb[0].mxu0
    %2298 = vdwg.mxu0
    %2299 = vmatprep.subr.mxu0 0.0
    %v2300 = vand.u32 %v2068, 4294901760
    %2301 = vmatpush1.msra.mxu0 %v2300
    %2302 = vmatprep.subr.mxu0 0.0
    %2303 = vmatpush1.msra.mxu0 0.0
    %2304 = vmatprep.subr.mxu0 0.0
    %2305 = vmatpush1.msra.mxu0 0.0
    %2306 = vmatprep.subr.mxu0 0.0
    %2307 = vmatpush1.msra.mxu0 0.0
    %2308 = vmatprep.subr.mxu0 0.0
    %2309 = vmatpush1.msra.mxu0 0.0
    %2310 = vmatprep.subr.mxu0 0.0
    %2311 = vmatpush1.msra.mxu0 0.0
    %2312 = vmatprep.subr.mxu0 0.0
    %2313 = vmatpush1.msra.mxu0 0.0
    %2314 = vmatprep.subr.mxu0 0.0
    %2315 = vmatpush1.msra.mxu0 0.0
    %2316 = vmatprep.subr.mxu0 0.0
    %2317 = vmatpush1.msra.mxu0 0.0
    %2318 = vmatprep.subr.mxu0 0.0
    %2319 = vmatpush1.msra.mxu0 0.0
    %2320 = vmatprep.subr.mxu0 0.0
    %2321 = vmatpush1.msra.mxu0 0.0
    %2322 = vmatprep.subr.mxu0 0.0
    %2323 = vmatpush1.msra.mxu0 0.0
    %2324 = vmatprep.subr.mxu0 0.0
    %2325 = vmatpush1.msra.mxu0 0.0
    %2326 = vmatprep.subr.mxu0 0.0
    %2327 = vmatpush1.msra.mxu0 0.0
    %2328 = vmatprep.subr.mxu0 0.0
    %2329 = vmatpush1.msra.mxu0 0.0
    %2330 = vmatprep.subr.mxu0 0.0
    %2331 = vmatpush1.msra.mxu0 0.0
    %2332 = vmatprep.subr.mxu0 0.0
    %2333 = vmatpush1.msra.mxu0 0.0
    %2334 = vmatprep.subr.mxu0 0.0
    %2335 = vmatpush1.msra.mxu0 0.0
    %2336 = vmatprep.subr.mxu0 0.0
    %2337 = vmatpush1.msra.mxu0 0.0
    %2338 = vmatprep.subr.mxu0 0.0
    %2339 = vmatpush1.msra.mxu0 0.0
    %2340 = vmatprep.subr.mxu0 0.0
    %2341 = vmatpush1.msra.mxu0 0.0
    %2342 = vmatprep.subr.mxu0 0.0
    %2343 = vmatpush1.msra.mxu0 0.0
    %2344 = vmatprep.subr.mxu0 0.0
    %2345 = vmatpush1.msra.mxu0 0.0
    %2346 = vmatprep.subr.mxu0 0.0
    %2347 = vmatpush1.msra.mxu0 0.0
    %2348 = vmatprep.subr.mxu0 0.0
    %2349 = vmatpush1.msra.mxu0 0.0
    %2350 = vmatprep.subr.mxu0 0.0
    %2351 = vmatpush1.msra.mxu0 0.0
    %2352 = vmatprep.subr.mxu0 0.0
    %2353 = vmatpush1.msra.mxu0 0.0
    %2354 = vmatprep.subr.mxu0 0.0
    %2355 = vmatpush1.msra.mxu0 0.0
    %2356 = vmatprep.subr.mxu0 0.0
    %2357 = vmatpush1.msra.mxu0 0.0
    %2358 = vmatprep.subr.mxu0 0.0
    %2359 = vmatpush1.msra.mxu0 0.0
    %2360 = vmatprep.subr.mxu0 0.0
    %2361 = vmatpush1.msra.mxu0 0.0
    %2362 = vmatprep.subr.mxu0 0.0
    %2363 = vmatpush1.msra.mxu0 0.0
    %2364 = vmatprep.mubr.f32.mxu0 0.0
    %v2365 = vand.u32 %v2071, 4294901760
    %v2366 = vsub.f32 %v2071, %v2365
    %v2367 = vand.u32 %v2366, 4294901760
    %2368 = vmatmul.mubr.f32.gmra.mrb[0].mxu0 %v2367
    %v2369 = vpop.f32.mrb[0].mxu0
    %v2370 = vadd.f32 %v2296, %v2369
    %v2371 = vpop.f32.mrb[0].mxu0
    %2372 = vdwg.mxu0
    %2373 = vmatprep.subr.mxu0 0.0
    %v2374 = vand.u32 %v2068, 4294901760
    %v2375 = vsub.f32 %v2068, %v2374
    %v2376 = vand.u32 %v2375, 4294901760
    %2377 = vmatpush1.msra.mxu0 %v2376
    %2378 = vmatprep.subr.mxu0 0.0
    %2379 = vmatpush1.msra.mxu0 0.0
    %2380 = vmatprep.subr.mxu0 0.0
    %2381 = vmatpush1.msra.mxu0 0.0
    %2382 = vmatprep.subr.mxu0 0.0
    %2383 = vmatpush1.msra.mxu0 0.0
    %2384 = vmatprep.subr.mxu0 0.0
    %2385 = vmatpush1.msra.mxu0 0.0
    %2386 = vmatprep.subr.mxu0 0.0
    %2387 = vmatpush1.msra.mxu0 0.0
    %2388 = vmatprep.subr.mxu0 0.0
    %2389 = vmatpush1.msra.mxu0 0.0
    %2390 = vmatprep.subr.mxu0 0.0
    %2391 = vmatpush1.msra.mxu0 0.0
    %2392 = vmatprep.subr.mxu0 0.0
    %2393 = vmatpush1.msra.mxu0 0.0
    %2394 = vmatprep.subr.mxu0 0.0
    %2395 = vmatpush1.msra.mxu0 0.0
    %2396 = vmatprep.subr.mxu0 0.0
    %2397 = vmatpush1.msra.mxu0 0.0
    %2398 = vmatprep.subr.mxu0 0.0
    %2399 = vmatpush1.msra.mxu0 0.0
    %2400 = vmatprep.subr.mxu0 0.0
    %2401 = vmatpush1.msra.mxu0 0.0
    %2402 = vmatprep.subr.mxu0 0.0
    %2403 = vmatpush1.msra.mxu0 0.0
    %2404 = vmatprep.subr.mxu0 0.0
    %2405 = vmatpush1.msra.mxu0 0.0
    %2406 = vmatprep.subr.mxu0 0.0
    %2407 = vmatpush1.msra.mxu0 0.0
    %2408 = vmatprep.subr.mxu0 0.0
    %2409 = vmatpush1.msra.mxu0 0.0
    %2410 = vmatprep.subr.mxu0 0.0
    %2411 = vmatpush1.msra.mxu0 0.0
    %2412 = vmatprep.subr.mxu0 0.0
    %2413 = vmatpush1.msra.mxu0 0.0
    %2414 = vmatprep.subr.mxu0 0.0
    %2415 = vmatpush1.msra.mxu0 0.0
    %2416 = vmatprep.subr.mxu0 0.0
    %2417 = vmatpush1.msra.mxu0 0.0
    %2418 = vmatprep.subr.mxu0 0.0
    %2419 = vmatpush1.msra.mxu0 0.0
    %2420 = vmatprep.subr.mxu0 0.0
    %2421 = vmatpush1.msra.mxu0 0.0
    %2422 = vmatprep.subr.mxu0 0.0
    %2423 = vmatpush1.msra.mxu0 0.0
    %2424 = vmatprep.subr.mxu0 0.0
    %2425 = vmatpush1.msra.mxu0 0.0
    %2426 = vmatprep.subr.mxu0 0.0
    %2427 = vmatpush1.msra.mxu0 0.0
    %2428 = vmatprep.subr.mxu0 0.0
    %2429 = vmatpush1.msra.mxu0 0.0
    %2430 = vmatprep.subr.mxu0 0.0
    %2431 = vmatpush1.msra.mxu0 0.0
    %2432 = vmatprep.subr.mxu0 0.0
    %2433 = vmatpush1.msra.mxu0 0.0
    %2434 = vmatprep.subr.mxu0 0.0
    %2435 = vmatpush1.msra.mxu0 0.0
    %2436 = vmatprep.subr.mxu0 0.0
    %2437 = vmatpush1.msra.mxu0 0.0
    %2438 = vmatprep.subr.mxu0 0.0
    %2439 = vmatpush1.msra.mxu0 0.0
    %2440 = vmatprep.mubr.f32.mxu0 0.0
    %v2441 = vand.u32 %v2071, 4294901760
    %2442 = vmatmul.mubr.f32.gmra.mrb[0].mxu0 %v2441
    %v2443 = vpop.f32.mrb[0].mxu0
    %v2444 = vadd.f32 %v2370, %v2443
    %v2445 = vpop.f32.mrb[0].mxu0
    %2446 = vdwg.mxu0
    %2447 = vmatprep.subr.mxu0 0.0
    %v2448 = vand.u32 %v2068, 4294901760
    %2449 = vmatpush1.msra.mxu0 %v2448
    %2450 = vmatprep.subr.mxu0 0.0
    %2451 = vmatpush1.msra.mxu0 0.0
    %2452 = vmatprep.subr.mxu0 0.0
    %2453 = vmatpush1.msra.mxu0 0.0
    %2454 = vmatprep.subr.mxu0 0.0
    %2455 = vmatpush1.msra.mxu0 0.0
    %2456 = vmatprep.subr.mxu0 0.0
    %2457 = vmatpush1.msra.mxu0 0.0
    %2458 = vmatprep.subr.mxu0 0.0
    %2459 = vmatpush1.msra.mxu0 0.0
    %2460 = vmatprep.subr.mxu0 0.0
    %2461 = vmatpush1.msra.mxu0 0.0
    %2462 = vmatprep.subr.mxu0 0.0
    %2463 = vmatpush1.msra.mxu0 0.0
    %2464 = vmatprep.subr.mxu0 0.0
    %2465 = vmatpush1.msra.mxu0 0.0
    %2466 = vmatprep.subr.mxu0 0.0
    %2467 = vmatpush1.msra.mxu0 0.0
    %2468 = vmatprep.subr.mxu0 0.0
    %2469 = vmatpush1.msra.mxu0 0.0
    %2470 = vmatprep.subr.mxu0 0.0
    %2471 = vmatpush1.msra.mxu0 0.0
    %2472 = vmatprep.subr.mxu0 0.0
    %2473 = vmatpush1.msra.mxu0 0.0
    %2474 = vmatprep.subr.mxu0 0.0
    %2475 = vmatpush1.msra.mxu0 0.0
    %2476 = vmatprep.subr.mxu0 0.0
    %2477 = vmatpush1.msra.mxu0 0.0
    %2478 = vmatprep.subr.mxu0 0.0
    %2479 = vmatpush1.msra.mxu0 0.0
    %2480 = vmatprep.subr.mxu0 0.0
    %2481 = vmatpush1.msra.mxu0 0.0
    %2482 = vmatprep.subr.mxu0 0.0
    %2483 = vmatpush1.msra.mxu0 0.0
    %2484 = vmatprep.subr.mxu0 0.0
    %2485 = vmatpush1.msra.mxu0 0.0
    %2486 = vmatprep.subr.mxu0 0.0
    %2487 = vmatpush1.msra.mxu0 0.0
    %2488 = vmatprep.subr.mxu0 0.0
    %2489 = vmatpush1.msra.mxu0 0.0
    %2490 = vmatprep.subr.mxu0 0.0
    %2491 = vmatpush1.msra.mxu0 0.0
    %2492 = vmatprep.subr.mxu0 0.0
    %2493 = vmatpush1.msra.mxu0 0.0
    %2494 = vmatprep.subr.mxu0 0.0
    %2495 = vmatpush1.msra.mxu0 0.0
    %2496 = vmatprep.subr.mxu0 0.0
    %2497 = vmatpush1.msra.mxu0 0.0
    %2498 = vmatprep.subr.mxu0 0.0
    %2499 = vmatpush1.msra.mxu0 0.0
    %2500 = vmatprep.subr.mxu0 0.0
    %2501 = vmatpush1.msra.mxu0 0.0
    %2502 = vmatprep.subr.mxu0 0.0
    %2503 = vmatpush1.msra.mxu0 0.0
    %2504 = vmatprep.subr.mxu0 0.0
    %2505 = vmatpush1.msra.mxu0 0.0
    %2506 = vmatprep.subr.mxu0 0.0
    %2507 = vmatpush1.msra.mxu0 0.0
    %2508 = vmatprep.subr.mxu0 0.0
    %2509 = vmatpush1.msra.mxu0 0.0
    %2510 = vmatprep.subr.mxu0 0.0
    %2511 = vmatpush1.msra.mxu0 0.0
    %2512 = vmatprep.mubr.f32.mxu0 0.0
    %v2513 = vand.u32 %v2071, 4294901760
    %2514 = vmatmul.mubr.f32.gmra.mrb[0].mxu0 %v2513
    %v2515 = vpop.f32.mrb[0].mxu0
    %v2516 = vadd.f32 %v2444, %v2515
    %v2517 = vpop.f32.mrb[0].mxu0
    %2518 = vdwg.mxu0
    %v2519 = vld [vmem:[%s4] sm:$0xff]
    %v2520 = vld [vmem:[%s4 + $0x8] sm:$0xff]
    %v2521 = vld [vmem:[%s4 + $0x10] sm:$0xff]
    %v2522 = vld [vmem:[%s4 + $0x18] sm:$0xff]
    %v2523 = vld [vmem:[%s5] sm:$0x1]
    %v2525 = vlaneseq
    %v2526 = vshrl.u32 %v2525, 7
    %v2527 = vsub.s32 0, %v2526
    %v2528 = vrot.slane %v2523, %v2527
    %v2531 = vsel %vm35, %v2064, 0
    %v2534 = vsel %vm35, %v2516, 0
    %2536 = vmatprep.subr.mxu0 0.0
    %v2537 = vand.u32 %v2519, 4294901760
    %2538 = vmatpush1.msra.mxu0 %v2537
    %2539 = vmatprep.subr.mxu0 0.0
    %v2540 = vand.u32 %v2520, 4294901760
    %2541 = vmatpush1.msra.mxu0 %v2540
    %2542 = vmatprep.subr.mxu0 0.0
    %v2543 = vand.u32 %v2521, 4294901760
    %2544 = vmatpush1.msra.mxu0 %v2543
    %2545 = vmatprep.subr.mxu0 0.0
    %v2546 = vand.u32 %v2522, 4294901760
    %2547 = vmatpush1.msra.mxu0 %v2546
    %2548 = vmatprep.subr.mxu0 0.0
    %2549 = vmatpush1.msra.mxu0 0.0
    %2550 = vmatprep.subr.mxu0 0.0
    %2551 = vmatpush1.msra.mxu0 0.0
    %2552 = vmatprep.subr.mxu0 0.0
    %2553 = vmatpush1.msra.mxu0 0.0
    %2554 = vmatprep.subr.mxu0 0.0
    %2555 = vmatpush1.msra.mxu0 0.0
    %2556 = vmatprep.subr.mxu0 0.0
    %2557 = vmatpush1.msra.mxu0 0.0
    %2558 = vmatprep.subr.mxu0 0.0
    %2559 = vmatpush1.msra.mxu0 0.0
    %2560 = vmatprep.subr.mxu0 0.0
    %2561 = vmatpush1.msra.mxu0 0.0
    %2562 = vmatprep.subr.mxu0 0.0
    %2563 = vmatpush1.msra.mxu0 0.0
    %2564 = vmatprep.subr.mxu0 0.0
    %2565 = vmatpush1.msra.mxu0 0.0
    %2566 = vmatprep.subr.mxu0 0.0
    %2567 = vmatpush1.msra.mxu0 0.0
    %2568 = vmatprep.subr.mxu0 0.0
    %2569 = vmatpush1.msra.mxu0 0.0
    %2570 = vmatprep.subr.mxu0 0.0
    %2571 = vmatpush1.msra.mxu0 0.0
    %2572 = vmatprep.subr.mxu0 0.0
    %2573 = vmatpush1.msra.mxu0 0.0
    %2574 = vmatprep.subr.mxu0 0.0
    %2575 = vmatpush1.msra.mxu0 0.0
    %2576 = vmatprep.subr.mxu0 0.0
    %2577 = vmatpush1.msra.mxu0 0.0
    %2578 = vmatprep.subr.mxu0 0.0
    %2579 = vmatpush1.msra.mxu0 0.0
    %2580 = vmatprep.subr.mxu0 0.0
    %2581 = vmatpush1.msra.mxu0 0.0
    %2582 = vmatprep.subr.mxu0 0.0
    %2583 = vmatpush1.msra.mxu0 0.0
    %2584 = vmatprep.subr.mxu0 0.0
    %2585 = vmatpush1.msra.mxu0 0.0
    %2586 = vmatprep.subr.mxu0 0.0
    %2587 = vmatpush1.msra.mxu0 0.0
    %2588 = vmatprep.subr.mxu0 0.0
    %2589 = vmatpush1.msra.mxu0 0.0
    %2590 = vmatprep.subr.mxu0 0.0
    %2591 = vmatpush1.msra.mxu0 0.0
    %2592 = vmatprep.subr.mxu0 0.0
    %2593 = vmatpush1.msra.mxu0 0.0
    %2594 = vmatprep.subr.mxu0 0.0
    %2595 = vmatpush1.msra.mxu0 0.0
    %2596 = vmatprep.subr.mxu0 0.0
    %2597 = vmatpush1.msra.mxu0 0.0
    %2598 = vmatprep.subr.mxu0 0.0
    %2599 = vmatpush1.msra.mxu0 0.0
    %2600 = vmatprep.subr.mxu0 0.0
    %2601 = vmatpush1.msra.mxu0 0.0
    %2602 = vmatprep.subr.mxu0 0.0
    %2603 = vmatpush1.msra.mxu0 0.0
    %2604 = vmatprep.mubr.f32.mxu0 0.0
    %v2605 = vand.u32 %v2531, 4294901760
    %v2606 = vsub.f32 %v2531, %v2605
    %v2607 = vand.u32 %v2606, 4294901760
    %v2608 = vsub.f32 %v2606, %v2607
    %v2609 = vand.u32 %v2608, 4294901760
    %2610 = vmatmul.mubr.f32.gmra.mrb[0].mxu0 %v2609
    %v2611 = vpop.f32.mrb[0].mxu0
    %v2612 = vadd.f32 %v2528, %v2611
    %v2613 = vpop.f32.mrb[0].mxu0
    %2614 = vmatprep.mubr.f32.mxu0 0.0
    %v2615 = vand.u32 %v2534, 4294901760
    %v2616 = vsub.f32 %v2534, %v2615
    %v2617 = vand.u32 %v2616, 4294901760
    %v2618 = vsub.f32 %v2616, %v2617
    %v2619 = vand.u32 %v2618, 4294901760
    %2620 = vmatmul.mubr.f32.gmra.mrb[0].mxu0 %v2619
    %v2621 = vpop.f32.mrb[0].mxu0
    %v2622 = vadd.f32 %v2528, %v2621
    %v2623 = vpop.f32.mrb[0].mxu0
    %2624 = vdwg.mxu0
    %2625 = vmatprep.subr.mxu0 0.0
    %v2626 = vand.u32 %v2519, 4294901760
    %v2627 = vsub.f32 %v2519, %v2626
    %v2628 = vand.u32 %v2627, 4294901760
    %v2629 = vsub.f32 %v2627, %v2628
    %v2630 = vand.u32 %v2629, 4294901760
    %2631 = vmatpush1.msra.mxu0 %v2630
    %2632 = vmatprep.subr.mxu0 0.0
    %v2633 = vand.u32 %v2520, 4294901760
    %v2634 = vsub.f32 %v2520, %v2633
    %v2635 = vand.u32 %v2634, 4294901760
    %v2636 = vsub.f32 %v2634, %v2635
    %v2637 = vand.u32 %v2636, 4294901760
    %2638 = vmatpush1.msra.mxu0 %v2637
    %2639 = vmatprep.subr.mxu0 0.0
    %v2640 = vand.u32 %v2521, 4294901760
    %v2641 = vsub.f32 %v2521, %v2640
    %v2642 = vand.u32 %v2641, 4294901760
    %v2643 = vsub.f32 %v2641, %v2642
    %v2644 = vand.u32 %v2643, 4294901760
    %2645 = vmatpush1.msra.mxu0 %v2644
    %2646 = vmatprep.subr.mxu0 0.0
    %v2647 = vand.u32 %v2522, 4294901760
    %v2648 = vsub.f32 %v2522, %v2647
    %v2649 = vand.u32 %v2648, 4294901760
    %v2650 = vsub.f32 %v2648, %v2649
    %v2651 = vand.u32 %v2650, 4294901760
    %2652 = vmatpush1.msra.mxu0 %v2651
    %2653 = vmatprep.subr.mxu0 0.0
    %2654 = vmatpush1.msra.mxu0 0.0
    %2655 = vmatprep.subr.mxu0 0.0
    %2656 = vmatpush1.msra.mxu0 0.0
    %2657 = vmatprep.subr.mxu0 0.0
    %2658 = vmatpush1.msra.mxu0 0.0
    %2659 = vmatprep.subr.mxu0 0.0
    %2660 = vmatpush1.msra.mxu0 0.0
    %2661 = vmatprep.subr.mxu0 0.0
    %2662 = vmatpush1.msra.mxu0 0.0
    %2663 = vmatprep.subr.mxu0 0.0
    %2664 = vmatpush1.msra.mxu0 0.0
    %2665 = vmatprep.subr.mxu0 0.0
    %2666 = vmatpush1.msra.mxu0 0.0
    %2667 = vmatprep.subr.mxu0 0.0
    %2668 = vmatpush1.msra.mxu0 0.0
    %2669 = vmatprep.subr.mxu0 0.0
    %2670 = vmatpush1.msra.mxu0 0.0
    %2671 = vmatprep.subr.mxu0 0.0
    %2672 = vmatpush1.msra.mxu0 0.0
    %2673 = vmatprep.subr.mxu0 0.0
    %2674 = vmatpush1.msra.mxu0 0.0
    %2675 = vmatprep.subr.mxu0 0.0
    %2676 = vmatpush1.msra.mxu0 0.0
    %2677 = vmatprep.subr.mxu0 0.0
    %2678 = vmatpush1.msra.mxu0 0.0
    %2679 = vmatprep.subr.mxu0 0.0
    %2680 = vmatpush1.msra.mxu0 0.0
    %2681 = vmatprep.subr.mxu0 0.0
    %2682 = vmatpush1.msra.mxu0 0.0
    %2683 = vmatprep.subr.mxu0 0.0
    %2684 = vmatpush1.msra.mxu0 0.0
    %2685 = vmatprep.subr.mxu0 0.0
    %2686 = vmatpush1.msra.mxu0 0.0
    %2687 = vmatprep.subr.mxu0 0.0
    %2688 = vmatpush1.msra.mxu0 0.0
    %2689 = vmatprep.subr.mxu0 0.0
    %2690 = vmatpush1.msra.mxu0 0.0
    %2691 = vmatprep.subr.mxu0 0.0
    %2692 = vmatpush1.msra.mxu0 0.0
    %2693 = vmatprep.subr.mxu0 0.0
    %2694 = vmatpush1.msra.mxu0 0.0
    %2695 = vmatprep.subr.mxu0 0.0
    %2696 = vmatpush1.msra.mxu0 0.0
    %2697 = vmatprep.subr.mxu0 0.0
    %2698 = vmatpush1.msra.mxu0 0.0
    %2699 = vmatprep.subr.mxu0 0.0
    %2700 = vmatpush1.msra.mxu0 0.0
    %2701 = vmatprep.subr.mxu0 0.0
    %2702 = vmatpush1.msra.mxu0 0.0
    %2703 = vmatprep.subr.mxu0 0.0
    %2704 = vmatpush1.msra.mxu0 0.0
    %2705 = vmatprep.subr.mxu0 0.0
    %2706 = vmatpush1.msra.mxu0 0.0
    %2707 = vmatprep.subr.mxu0 0.0
    %2708 = vmatpush1.msra.mxu0 0.0
    %2709 = vmatprep.mubr.f32.mxu0 0.0
    %v2710 = vand.u32 %v2531, 4294901760
    %2711 = vmatmul.mubr.f32.gmra.mrb[0].mxu0 %v2710
    %v2712 = vpop.f32.mrb[0].mxu0
    %v2713 = vadd.f32 %v2612, %v2712
    %v2714 = vpop.f32.mrb[0].mxu0
    %2715 = vmatprep.mubr.f32.mxu0 0.0
    %v2716 = vand.u32 %v2534, 4294901760
    %2717 = vmatmul.mubr.f32.gmra.mrb[0].mxu0 %v2716
    %v2718 = vpop.f32.mrb[0].mxu0
    %v2719 = vadd.f32 %v2622, %v2718
    %v2720 = vpop.f32.mrb[0].mxu0
    %2721 = vdwg.mxu0
    %2722 = vmatprep.subr.mxu0 0.0
    %v2723 = vand.u32 %v2519, 4294901760
    %v2724 = vsub.f32 %v2519, %v2723
    %2725 = vmatpush1.msra.mxu0 %v2724
    %2726 = vmatprep.subr.mxu0 0.0
    %v2727 = vand.u32 %v2520, 4294901760
    %v2728 = vsub.f32 %v2520, %v2727
    %2729 = vmatpush1.msra.mxu0 %v2728
    %2730 = vmatprep.subr.mxu0 0.0
    %v2731 = vand.u32 %v2521, 4294901760
    %v2732 = vsub.f32 %v2521, %v2731
    %2733 = vmatpush1.msra.mxu0 %v2732
    %2734 = vmatprep.subr.mxu0 0.0
    %v2735 = vand.u32 %v2522, 4294901760
    %v2736 = vsub.f32 %v2522, %v2735
    %2737 = vmatpush1.msra.mxu0 %v2736
    %2738 = vmatprep.subr.mxu0 0.0
    %2739 = vmatpush1.msra.mxu0 0.0
    %2740 = vmatprep.subr.mxu0 0.0
    %2741 = vmatpush1.msra.mxu0 0.0
    %2742 = vmatprep.subr.mxu0 0.0
    %2743 = vmatpush1.msra.mxu0 0.0
    %2744 = vmatprep.subr.mxu0 0.0
    %2745 = vmatpush1.msra.mxu0 0.0
    %2746 = vmatprep.subr.mxu0 0.0
    %2747 = vmatpush1.msra.mxu0 0.0
    %2748 = vmatprep.subr.mxu0 0.0
    %2749 = vmatpush1.msra.mxu0 0.0
    %2750 = vmatprep.subr.mxu0 0.0
    %2751 = vmatpush1.msra.mxu0 0.0
    %2752 = vmatprep.subr.mxu0 0.0
    %2753 = vmatpush1.msra.mxu0 0.0
    %2754 = vmatprep.subr.mxu0 0.0
    %2755 = vmatpush1.msra.mxu0 0.0
    %2756 = vmatprep.subr.mxu0 0.0
    %2757 = vmatpush1.msra.mxu0 0.0
    %2758 = vmatprep.subr.mxu0 0.0
    %2759 = vmatpush1.msra.mxu0 0.0
    %2760 = vmatprep.subr.mxu0 0.0
    %2761 = vmatpush1.msra.mxu0 0.0
    %2762 = vmatprep.subr.mxu0 0.0
    %2763 = vmatpush1.msra.mxu0 0.0
    %2764 = vmatprep.subr.mxu0 0.0
    %2765 = vmatpush1.msra.mxu0 0.0
    %2766 = vmatprep.subr.mxu0 0.0
    %2767 = vmatpush1.msra.mxu0 0.0
    %2768 = vmatprep.subr.mxu0 0.0
    %2769 = vmatpush1.msra.mxu0 0.0
    %2770 = vmatprep.subr.mxu0 0.0
    %2771 = vmatpush1.msra.mxu0 0.0
    %2772 = vmatprep.subr.mxu0 0.0
    %2773 = vmatpush1.msra.mxu0 0.0
    %2774 = vmatprep.subr.mxu0 0.0
    %2775 = vmatpush1.msra.mxu0 0.0
    %2776 = vmatprep.subr.mxu0 0.0
    %2777 = vmatpush1.msra.mxu0 0.0
    %2778 = vmatprep.subr.mxu0 0.0
    %2779 = vmatpush1.msra.mxu0 0.0
    %2780 = vmatprep.subr.mxu0 0.0
    %2781 = vmatpush1.msra.mxu0 0.0
    %2782 = vmatprep.subr.mxu0 0.0
    %2783 = vmatpush1.msra.mxu0 0.0
    %2784 = vmatprep.subr.mxu0 0.0
    %2785 = vmatpush1.msra.mxu0 0.0
    %2786 = vmatprep.subr.mxu0 0.0
    %2787 = vmatpush1.msra.mxu0 0.0
    %2788 = vmatprep.subr.mxu0 0.0
    %2789 = vmatpush1.msra.mxu0 0.0
    %2790 = vmatprep.subr.mxu0 0.0
    %2791 = vmatpush1.msra.mxu0 0.0
    %2792 = vmatprep.subr.mxu0 0.0
    %2793 = vmatpush1.msra.mxu0 0.0
    %2794 = vmatprep.mubr.f32.mxu0 0.0
    %v2795 = vand.u32 %v2531, 4294901760
    %v2796 = vsub.f32 %v2531, %v2795
    %2797 = vmatmul.mubr.f32.gmra.mrb[0].mxu0 %v2796
    %v2798 = vpop.f32.mrb[0].mxu0
    %v2799 = vadd.f32 %v2713, %v2798
    %v2800 = vpop.f32.mrb[0].mxu0
    %2801 = vmatprep.mubr.f32.mxu0 0.0
    %v2802 = vand.u32 %v2534, 4294901760
    %v2803 = vsub.f32 %v2534, %v2802
    %2804 = vmatmul.mubr.f32.gmra.mrb[0].mxu0 %v2803
    %v2805 = vpop.f32.mrb[0].mxu0
    %v2806 = vadd.f32 %v2719, %v2805
    %v2807 = vpop.f32.mrb[0].mxu0
    %2808 = vdwg.mxu0
    %2809 = vmatprep.subr.mxu0 0.0
    %v2810 = vand.u32 %v2519, 4294901760
    %2811 = vmatpush1.msra.mxu0 %v2810
    %2812 = vmatprep.subr.mxu0 0.0
    %v2813 = vand.u32 %v2520, 4294901760
    %2814 = vmatpush1.msra.mxu0 %v2813
    %2815 = vmatprep.subr.mxu0 0.0
    %v2816 = vand.u32 %v2521, 4294901760
    %2817 = vmatpush1.msra.mxu0 %v2816
    %2818 = vmatprep.subr.mxu0 0.0
    %v2819 = vand.u32 %v2522, 4294901760
    %2820 = vmatpush1.msra.mxu0 %v2819
    %2821 = vmatprep.subr.mxu0 0.0
    %2822 = vmatpush1.msra.mxu0 0.0
    %2823 = vmatprep.subr.mxu0 0.0
    %2824 = vmatpush1.msra.mxu0 0.0
    %2825 = vmatprep.subr.mxu0 0.0
    %2826 = vmatpush1.msra.mxu0 0.0
    %2827 = vmatprep.subr.mxu0 0.0
    %2828 = vmatpush1.msra.mxu0 0.0
    %2829 = vmatprep.subr.mxu0 0.0
    %2830 = vmatpush1.msra.mxu0 0.0
    %2831 = vmatprep.subr.mxu0 0.0
    %2832 = vmatpush1.msra.mxu0 0.0
    %2833 = vmatprep.subr.mxu0 0.0
    %2834 = vmatpush1.msra.mxu0 0.0
    %2835 = vmatprep.subr.mxu0 0.0
    %2836 = vmatpush1.msra.mxu0 0.0
    %2837 = vmatprep.subr.mxu0 0.0
    %2838 = vmatpush1.msra.mxu0 0.0
    %2839 = vmatprep.subr.mxu0 0.0
    %2840 = vmatpush1.msra.mxu0 0.0
    %2841 = vmatprep.subr.mxu0 0.0
    %2842 = vmatpush1.msra.mxu0 0.0
    %2843 = vmatprep.subr.mxu0 0.0
    %2844 = vmatpush1.msra.mxu0 0.0
    %2845 = vmatprep.subr.mxu0 0.0
    %2846 = vmatpush1.msra.mxu0 0.0
    %2847 = vmatprep.subr.mxu0 0.0
    %2848 = vmatpush1.msra.mxu0 0.0
    %2849 = vmatprep.subr.mxu0 0.0
    %2850 = vmatpush1.msra.mxu0 0.0
    %2851 = vmatprep.subr.mxu0 0.0
    %2852 = vmatpush1.msra.mxu0 0.0
    %2853 = vmatprep.subr.mxu0 0.0
    %2854 = vmatpush1.msra.mxu0 0.0
    %2855 = vmatprep.subr.mxu0 0.0
    %2856 = vmatpush1.msra.mxu0 0.0
    %2857 = vmatprep.subr.mxu0 0.0
    %2858 = vmatpush1.msra.mxu0 0.0
    %2859 = vmatprep.subr.mxu0 0.0
    %2860 = vmatpush1.msra.mxu0 0.0
    %2861 = vmatprep.subr.mxu0 0.0
    %2862 = vmatpush1.msra.mxu0 0.0
    %2863 = vmatprep.subr.mxu0 0.0
    %2864 = vmatpush1.msra.mxu0 0.0
    %2865 = vmatprep.subr.mxu0 0.0
    %2866 = vmatpush1.msra.mxu0 0.0
    %2867 = vmatprep.subr.mxu0 0.0
    %2868 = vmatpush1.msra.mxu0 0.0
    %2869 = vmatprep.subr.mxu0 0.0
    %2870 = vmatpush1.msra.mxu0 0.0
    %2871 = vmatprep.subr.mxu0 0.0
    %2872 = vmatpush1.msra.mxu0 0.0
    %2873 = vmatprep.subr.mxu0 0.0
    %2874 = vmatpush1.msra.mxu0 0.0
    %2875 = vmatprep.subr.mxu0 0.0
    %2876 = vmatpush1.msra.mxu0 0.0
    %2877 = vmatprep.mubr.f32.mxu0 0.0
    %v2878 = vand.u32 %v2531, 4294901760
    %v2879 = vsub.f32 %v2531, %v2878
    %v2880 = vand.u32 %v2879, 4294901760
    %2881 = vmatmul.mubr.f32.gmra.mrb[0].mxu0 %v2880
    %v2882 = vpop.f32.mrb[0].mxu0
    %v2883 = vadd.f32 %v2799, %v2882
    %v2884 = vpop.f32.mrb[0].mxu0
    %2885 = vmatprep.mubr.f32.mxu0 0.0
    %v2886 = vand.u32 %v2534, 4294901760
    %v2887 = vsub.f32 %v2534, %v2886
    %v2888 = vand.u32 %v2887, 4294901760
    %2889 = vmatmul.mubr.f32.gmra.mrb[0].mxu0 %v2888
    %v2890 = vpop.f32.mrb[0].mxu0
    %v2891 = vadd.f32 %v2806, %v2890
    %v2892 = vpop.f32.mrb[0].mxu0
    %2893 = vdwg.mxu0
    %2894 = vmatprep.subr.mxu0 0.0
    %v2895 = vand.u32 %v2519, 4294901760
    %v2896 = vsub.f32 %v2519, %v2895
    %v2897 = vand.u32 %v2896, 4294901760
    %2898 = vmatpush1.msra.mxu0 %v2897
    %2899 = vmatprep.subr.mxu0 0.0
    %v2900 = vand.u32 %v2520, 4294901760
    %v2901 = vsub.f32 %v2520, %v2900
    %v2902 = vand.u32 %v2901, 4294901760
    %2903 = vmatpush1.msra.mxu0 %v2902
    %2904 = vmatprep.subr.mxu0 0.0
    %v2905 = vand.u32 %v2521, 4294901760
    %v2906 = vsub.f32 %v2521, %v2905
    %v2907 = vand.u32 %v2906, 4294901760
    %2908 = vmatpush1.msra.mxu0 %v2907
    %2909 = vmatprep.subr.mxu0 0.0
    %v2910 = vand.u32 %v2522, 4294901760
    %v2911 = vsub.f32 %v2522, %v2910
    %v2912 = vand.u32 %v2911, 4294901760
    %2913 = vmatpush1.msra.mxu0 %v2912
    %2914 = vmatprep.subr.mxu0 0.0
    %2915 = vmatpush1.msra.mxu0 0.0
    %2916 = vmatprep.subr.mxu0 0.0
    %2917 = vmatpush1.msra.mxu0 0.0
    %2918 = vmatprep.subr.mxu0 0.0
    %2919 = vmatpush1.msra.mxu0 0.0
    %2920 = vmatprep.subr.mxu0 0.0
    %2921 = vmatpush1.msra.mxu0 0.0
    %2922 = vmatprep.subr.mxu0 0.0
    %2923 = vmatpush1.msra.mxu0 0.0
    %2924 = vmatprep.subr.mxu0 0.0
    %2925 = vmatpush1.msra.mxu0 0.0
    %2926 = vmatprep.subr.mxu0 0.0
    %2927 = vmatpush1.msra.mxu0 0.0
    %2928 = vmatprep.subr.mxu0 0.0
    %2929 = vmatpush1.msra.mxu0 0.0
    %2930 = vmatprep.subr.mxu0 0.0
    %2931 = vmatpush1.msra.mxu0 0.0
    %2932 = vmatprep.subr.mxu0 0.0
    %2933 = vmatpush1.msra.mxu0 0.0
    %2934 = vmatprep.subr.mxu0 0.0
    %2935 = vmatpush1.msra.mxu0 0.0
    %2936 = vmatprep.subr.mxu0 0.0
    %2937 = vmatpush1.msra.mxu0 0.0
    %2938 = vmatprep.subr.mxu0 0.0
    %2939 = vmatpush1.msra.mxu0 0.0
    %2940 = vmatprep.subr.mxu0 0.0
    %2941 = vmatpush1.msra.mxu0 0.0
    %2942 = vmatprep.subr.mxu0 0.0
    %2943 = vmatpush1.msra.mxu0 0.0
    %2944 = vmatprep.subr.mxu0 0.0
    %2945 = vmatpush1.msra.mxu0 0.0
    %2946 = vmatprep.subr.mxu0 0.0
    %2947 = vmatpush1.msra.mxu0 0.0
    %2948 = vmatprep.subr.mxu0 0.0
    %2949 = vmatpush1.msra.mxu0 0.0
    %2950 = vmatprep.subr.mxu0 0.0
    %2951 = vmatpush1.msra.mxu0 0.0
    %2952 = vmatprep.subr.mxu0 0.0
    %2953 = vmatpush1.msra.mxu0 0.0
    %2954 = vmatprep.subr.mxu0 0.0
    %2955 = vmatpush1.msra.mxu0 0.0
    %2956 = vmatprep.subr.mxu0 0.0
    %2957 = vmatpush1.msra.mxu0 0.0
    %2958 = vmatprep.subr.mxu0 0.0
    %2959 = vmatpush1.msra.mxu0 0.0
    %2960 = vmatprep.subr.mxu0 0.0
    %2961 = vmatpush1.msra.mxu0 0.0
    %2962 = vmatprep.subr.mxu0 0.0
    %2963 = vmatpush1.msra.mxu0 0.0
    %2964 = vmatprep.subr.mxu0 0.0
    %2965 = vmatpush1.msra.mxu0 0.0
    %2966 = vmatprep.subr.mxu0 0.0
    %2967 = vmatpush1.msra.mxu0 0.0
    %2968 = vmatprep.subr.mxu0 0.0
    %2969 = vmatpush1.msra.mxu0 0.0
    %2970 = vmatprep.mubr.f32.mxu0 0.0
    %v2971 = vand.u32 %v2531, 4294901760
    %2972 = vmatmul.mubr.f32.gmra.mrb[0].mxu0 %v2971
    %v2973 = vpop.f32.mrb[0].mxu0
    %v2974 = vadd.f32 %v2883, %v2973
    %v2975 = vpop.f32.mrb[0].mxu0
    %2976 = vmatprep.mubr.f32.mxu0 0.0
    %v2977 = vand.u32 %v2534, 4294901760
    %2978 = vmatmul.mubr.f32.gmra.mrb[0].mxu0 %v2977
    %v2979 = vpop.f32.mrb[0].mxu0
    %v2980 = vadd.f32 %v2891, %v2979
    %v2981 = vpop.f32.mrb[0].mxu0
    %2982 = vdwg.mxu0
    %2983 = vmatprep.subr.mxu0 0.0
    %v2984 = vand.u32 %v2519, 4294901760
    %2985 = vmatpush1.msra.mxu0 %v2984
    %2986 = vmatprep.subr.mxu0 0.0
    %v2987 = vand.u32 %v2520, 4294901760
    %2988 = vmatpush1.msra.mxu0 %v2987
    %2989 = vmatprep.subr.mxu0 0.0
    %v2990 = vand.u32 %v2521, 4294901760
    %2991 = vmatpush1.msra.mxu0 %v2990
    %2992 = vmatprep.subr.mxu0 0.0
    %v2993 = vand.u32 %v2522, 4294901760
    %2994 = vmatpush1.msra.mxu0 %v2993
    %2995 = vmatprep.subr.mxu0 0.0
    %2996 = vmatpush1.msra.mxu0 0.0
    %2997 = vmatprep.subr.mxu0 0.0
    %2998 = vmatpush1.msra.mxu0 0.0
    %2999 = vmatprep.subr.mxu0 0.0
    %3000 = vmatpush1.msra.mxu0 0.0
    %3001 = vmatprep.subr.mxu0 0.0
    %3002 = vmatpush1.msra.mxu0 0.0
    %3003 = vmatprep.subr.mxu0 0.0
    %3004 = vmatpush1.msra.mxu0 0.0
    %3005 = vmatprep.subr.mxu0 0.0
    %3006 = vmatpush1.msra.mxu0 0.0
    %3007 = vmatprep.subr.mxu0 0.0
    %3008 = vmatpush1.msra.mxu0 0.0
    %3009 = vmatprep.subr.mxu0 0.0
    %3010 = vmatpush1.msra.mxu0 0.0
    %3011 = vmatprep.subr.mxu0 0.0
    %3012 = vmatpush1.msra.mxu0 0.0
    %3013 = vmatprep.subr.mxu0 0.0
    %3014 = vmatpush1.msra.mxu0 0.0
    %3015 = vmatprep.subr.mxu0 0.0
    %3016 = vmatpush1.msra.mxu0 0.0
    %3017 = vmatprep.subr.mxu0 0.0
    %3018 = vmatpush1.msra.mxu0 0.0
    %3019 = vmatprep.subr.mxu0 0.0
    %3020 = vmatpush1.msra.mxu0 0.0
    %3021 = vmatprep.subr.mxu0 0.0
    %3022 = vmatpush1.msra.mxu0 0.0
    %3023 = vmatprep.subr.mxu0 0.0
    %3024 = vmatpush1.msra.mxu0 0.0
    %3025 = vmatprep.subr.mxu0 0.0
    %3026 = vmatpush1.msra.mxu0 0.0
    %3027 = vmatprep.subr.mxu0 0.0
    %3028 = vmatpush1.msra.mxu0 0.0
    %3029 = vmatprep.subr.mxu0 0.0
    %3030 = vmatpush1.msra.mxu0 0.0
    %3031 = vmatprep.subr.mxu0 0.0
    %3032 = vmatpush1.msra.mxu0 0.0
    %3033 = vmatprep.subr.mxu0 0.0
    %3034 = vmatpush1.msra.mxu0 0.0
    %3035 = vmatprep.subr.mxu0 0.0
    %3036 = vmatpush1.msra.mxu0 0.0
    %3037 = vmatprep.subr.mxu0 0.0
    %3038 = vmatpush1.msra.mxu0 0.0
    %3039 = vmatprep.subr.mxu0 0.0
    %3040 = vmatpush1.msra.mxu0 0.0
    %3041 = vmatprep.subr.mxu0 0.0
    %3042 = vmatpush1.msra.mxu0 0.0
    %3043 = vmatprep.subr.mxu0 0.0
    %3044 = vmatpush1.msra.mxu0 0.0
    %3045 = vmatprep.subr.mxu0 0.0
    %3046 = vmatpush1.msra.mxu0 0.0
    %3047 = vmatprep.subr.mxu0 0.0
    %3048 = vmatpush1.msra.mxu0 0.0
    %3049 = vmatprep.subr.mxu0 0.0
    %3050 = vmatpush1.msra.mxu0 0.0
    %3051 = vmatprep.mubr.f32.mxu0 0.0
    %v3052 = vand.u32 %v2531, 4294901760
    %3053 = vmatmul.mubr.f32.gmra.mrb[0].mxu0 %v3052
    %v3054 = vpop.f32.mrb[0].mxu0
    %v3055 = vadd.f32 %v2974, %v3054
    %v3056 = vpop.f32.mrb[0].mxu0
    %3057 = vmatprep.mubr.f32.mxu0 0.0
    %v3058 = vand.u32 %v2534, 4294901760
    %3059 = vmatmul.mubr.f32.gmra.mrb[0].mxu0 %v3058
    %v3060 = vpop.f32.mrb[0].mxu0
    %v3061 = vadd.f32 %v2980, %v3060
    %v3062 = vpop.f32.mrb[0].mxu0
    %3063 = vdwg.mxu0
    %v3064 = vtanh.pop %v3055
    %v3065 = vtanh.pop %v3061
    %3066 = vst.msk [vmem:[#allocation2] sm:$0xff] %vm35, %v3064
    %3067 = vst.msk [vmem:[#allocation2 + $0x8] sm:$0xff] %vm35, %v3065
    // Predicated region
    $region26: #{attention_forward.1} parent=1 // pred_check
      _
    $region27: #{attention_forward.1} parent=1 // pred_check_branch
      %3069 = sbr.rel (0) target = $region29
    $region28: #{attention_forward.1} parent=1 // pred_region
      %s3071 = ssub.s32 256, 256
      %3072 = vsyncadd [#allocation3], %s3071
      %s3073 = sshll.u32 [#allocation2], 4
      %s3074 = int_to_ptr.vmem [resolvable:$true] %s3073
      %3079 = dma.vmem_to_hbm [thread:$0]  %s3074, 256, %s6, [#allocation3], 128, 128, 8
    $region29: #{attention_forward.1} parent=1 // pred_fallthru
      _
    // Predicated region
    $region30: #{attention_forward.1} parent=1 // pred_check
      _
    $region31: #{attention_forward.1} parent=1 // pred_check_branch
      %3081 = sbr.rel (0) target = $region33
    $region32: #{attention_forward.1} parent=1 // pred_region
      %s3083 = ssub.s32 256, 256
      %3084 = vsyncadd [#allocation5], %s3083
      %s3085 = sshll.u32 [#allocation4], 4
      %s3086 = int_to_ptr.vmem [resolvable:$true] %s3085
      %3091 = dma.vmem_to_hbm [thread:$0]  %s3086, 256, %s7, [#allocation5], 128, 128, 8
    $region33: #{attention_forward.1} parent=1 // pred_fallthru
      _
    // Predicated region
    $region34: #{attention_forward.1} parent=1 // pred_check
      _
    $region35: #{attention_forward.1} parent=1 // pred_check_branch
      %3093 = sbr.rel (0) target = $region37
    $region36: #{attention_forward.1} parent=1 // pred_region
      %3094 = dma.done [#allocation3], 256
    $region37: #{attention_forward.1} parent=1 // pred_fallthru
      _
    // Predicated region
    $region38: #{attention_forward.1} parent=1 // pred_check
      _
    $region39: #{attention_forward.1} parent=1 // pred_check_branch
      %3096 = sbr.rel (0) target = $region41
    $region40: #{attention_forward.1} parent=1 // pred_region
      %3097 = dma.done [#allocation5], 256
    $region41: #{attention_forward.1} parent=1 // pred_fallthru
      _
    %3098 = vsyncpa [#allocation3], 1
    %3099 = vsyncpa [#allocation5], 1

</llo_original>
